<compile_context>
chip_gen: v6e
topology: v6e:2x2x1
jax: 0.10.0
libtpu: 0.0.40
codegen_flags: <defaults>
</compile_context>

<pallas_src>
import numpy as np
import jax
import jax.numpy as jnp
from jax import lax
from jax.experimental import pallas as pl
from jax.experimental.pallas import tpu as pltpu


# ----------------------------- Pallas kernel --------------------------------

def _make_kernel(n_blocks, n_batch, channels, l_true, l_pad, eps=1e-5,
                 mxu_dtype=jnp.float32):
    dilations = [3 ** i for i in range(n_blocks)]
    inv_cnt = 1.0 / float(n_batch * l_true)
    need_mask = (l_pad != l_true)
    C = channels
    NC = n_batch * channels

    def kernel(x_ref, w3_ref, w1_ref, ws_ref, gam_ref, bet_ref, o_ref):
        # Valid-lane mask (padded lanes must never enter BN statistics).
        if need_mask:
            lane = lax.broadcasted_iota(jnp.int32, (1, l_pad), 1)
            maskf = (lane < l_true).astype(jnp.float32)
        else:
            maskf = None

        def leaky(v):
            return jnp.maximum(v, 0.2 * v)

        def mix(val, w):
            # One MXU dot per channel mix; batch handled by block-diagonal weights.
            if mxu_dtype != jnp.float32:
                val = val.astype(mxu_dtype)
                w = w.astype(mxu_dtype)
            return jnp.dot(w, val, preferred_element_type=jnp.float32)

        def batch_reduce(v):           # (N*C, 1) -> (C, 1): sum over batch replicas
            r = v[0:C, :]
            for b in range(1, n_batch):
                r = r + v[b * C:(b + 1) * C, :]
            return r

        def batch_tile(v):             # (C, 1) -> (N*C, 1)
            if n_batch == 1:
                return v
            return jnp.concatenate([v] * n_batch, axis=0)

        def bn_scale_shift(y, idx):
            # Single-pass masked batch statistics: var = E[y^2] - m^2.
            ysel = y if maskf is None else y * maskf
            s1 = batch_reduce(jnp.sum(ysel, axis=1, keepdims=True))
            s2 = batch_reduce(jnp.sum(ysel * ysel, axis=1, keepdims=True))
            m = s1 * inv_cnt
            var = s2 * inv_cnt - m * m
            scale = gam_ref[idx] * lax.rsqrt(var + eps)     # (C, 1)
            shift = bet_ref[idx] - m * scale
            return batch_tile(scale), batch_tile(shift)

        def fused_taps(a, d):
            # ReflectionPad1d(d) + the 3 taps of the kernel-3/dilation-d conv:
            #   tap1 (center) is `a` itself,
            #   tap0 / tap2 are +-d lane shifts with a d-lane reflected boundary.
            # Taps are stacked on the sublane axis so the conv becomes ONE dot
            # with K = 3*N*C.  Garbage lanes >= l_true never reach valid output
            # lanes and BN stats are masked, so no tail cleanup is needed.
            # TODO(synk): boundary reversal uses d (<=9) single-lane slices since
            #             lax.rev lowering is not relied upon inside Pallas TPU.
            left = [a[:, j:j + 1] for j in range(d, 0, -1)]                    # a[d]..a[1]
            t0 = jnp.concatenate(left + [a[:, :l_pad - d]], axis=1)
            right = [a[:, j:j + 1]
                     for j in range(l_true - 2, l_true - 2 - d, -1)]           # a[L-2]..a[L-1-d]
            p2 = [a[:, d:l_true]] + right
            if l_pad > l_true:
                p2.append(a[:, l_true:])          # don't-care filler for padded lanes
            t2 = jnp.concatenate(p2, axis=1)
            return jnp.concatenate([t0, a, t2], axis=0)      # (3*N*C, Lp)

        x = x_ref[...]                                        # (N*C, Lp) fp32
        for i in range(n_blocks):                             # static unroll
            d = dilations[i]

            # ---- shortcut path first (1x1 conv; bias cancels inside BN) ----
            s = mix(x, ws_ref[i])

            # ---- block path: LeakyReLU -> refpad + dilated conv (fused taps) ----
            a = leaky(x)
            y = mix(fused_taps(a, d), w3_ref[i])

            # BN1 (fused scale/shift) + LeakyReLU, then 1x1 conv.
            sc1, sh1 = bn_scale_shift(y, 3 * i + 0)
            y = leaky(y * sc1 + sh1)
            y = mix(y, w1_ref[i])

            # Fuse BN2(block), BN(shortcut) and the residual add into one pass.
            sc2, sh2 = bn_scale_shift(y, 3 * i + 1)
            scs, shs = bn_scale_shift(s, 3 * i + 2)
            x = y * sc2 + s * scs + (sh2 + shs)

        o_ref[...] = x.astype(o_ref.dtype)

    return kernel


# ------------------------------ glue / wrapper ------------------------------

def residual_conv_pallas(x_ncl, params, n_blocks=3, mxu_dtype=jnp.float32):
    n, c, l = x_ncl.shape
    d_max = 3 ** (n_blocks - 1)
    if d_max >= l:
        raise ValueError("ReflectionPad1d requires pad < input length")

    # Lane-dense layout: L on the 128-lane axis (padded), batch folded onto sublanes.
    l_pad = ((l + 127) // 128) * 128
    x_p = x_ncl.astype(jnp.float32)
    if l_pad != l:
        x_p = jnp.pad(x_p, ((0, 0), (0, 0), (0, l_pad - l)))
    x_flat = x_p.reshape(n * c, l_pad)                        # (N*C, Lp), pure reshape

    # Block-diagonal (over batch) weights so each channel mix is a single MXU dot.
    eye_n = jnp.eye(n, dtype=jnp.float32)

    def blkdiag(w):                                           # (O, I) -> (N*O, N*I)
        return jnp.kron(eye_n, w.astype(jnp.float32))

    w3_t = params['w3'].astype(jnp.float32)                   # torch layout (nb, O, I, 3)
    w3_blk = jnp.stack([
        jnp.concatenate([blkdiag(w3_t[i, :, :, k]) for k in range(3)], axis=1)
        for i in range(n_blocks)])                            # (nb, N*C, 3*N*C)
    w1_blk = jnp.stack([blkdiag(params['w1'][i, :, :, 0]) for i in range(n_blocks)])
    ws_blk = jnp.stack([blkdiag(params['ws'][i, :, :, 0]) for i in range(n_blocks)])

    gam = jnp.stack([params['g1'], params['g2'], params['gs']], axis=1)   # (nb, 3, C)
    bet = jnp.stack([params['be1'], params['be2'], params['bes']], axis=1)
    gam = gam.reshape(n_blocks * 3, c, 1).astype(jnp.float32)
    bet = bet.reshape(n_blocks * 3, c, 1).astype(jnp.float32)
    # conv biases params['b3'/'b1'/'bs'] are intentionally NOT passed: every conv is
    # immediately followed by a batch-stats BatchNorm, so they cancel exactly.
    # (This is training-mode only; eval-mode running stats would need the biases.)

    kernel = _make_kernel(n_blocks, n, c, l, l_pad, mxu_dtype=mxu_dtype)

    act_bytes = n * c * l_pad * 4
    param_bytes = int(sum(int(a.size) * a.dtype.itemsize
                          for a in (w3_blk, w1_blk, ws_blk, gam, bet)))
    # v7x has only 64 MiB VMEM per TensorCore: cap at 48 MiB (leave Mosaic headroom).
    vmem_bytes = int(min(48 * 1024 * 1024,
                         max(16 * 1024 * 1024, 16 * act_bytes + 2 * param_bytes)))
    nc = n * c
    flops = n_blocks * (2 * nc * (3 * nc) * l_pad       # fused 3-tap conv dot
                        + 2 * 2 * nc * nc * l_pad       # 1x1 block + shortcut dots
                        + 24 * nc * l_pad)              # elementwise / BN passes
    cost = pl.CostEstimate(flops=flops,
                           transcendentals=n_blocks * 3 * c,
                           bytes_accessed=2 * nc * l_pad * 4 + param_bytes)

    out_flat = pl.pallas_call(
        kernel,
        out_shape=jax.ShapeDtypeStruct((nc, l_pad), jnp.float32),
        in_specs=[pl.BlockSpec(memory_space=pltpu.MemorySpace.VMEM)] * 6,
        out_specs=pl.BlockSpec(memory_space=pltpu.MemorySpace.VMEM),
        compiler_params=pltpu.CompilerParams(vmem_limit_bytes=vmem_bytes),
        cost_estimate=cost,
    )(x_flat, w3_blk, w1_blk, ws_blk, gam, bet)

    return out_flat.reshape(n, c, l_pad)[:, :, :l]


# -------------------------- pure-JAX reference (NCL) ------------------------

def _ref_bn(x, gamma, beta, eps=1e-5):
    m = jnp.mean(x, axis=(0, 2), keepdims=True)
    v = jnp.mean((x - m) ** 2, axis=(0, 2), keepdims=True)
    return gamma[None, :, None] * (x - m) / jnp.sqrt(v + eps) + beta[None, :, None]


def _ref_leaky(x):
    return jnp.where(x > 0, x, 0.2 * x)


def _ref_refpad(x, p):
    left = x[:, :, 1:p + 1][:, :, ::-1]
    right = x[:, :, -p - 1:-1][:, :, ::-1]
    return jnp.concatenate([left, x, right], axis=-1)


def _ref_conv1d(x, w, b, dilation=1):
    y = lax.conv_general_dilated(x, w, window_strides=(1,), padding='VALID',
                                 rhs_dilation=(dilation,),
                                 dimension_numbers=('NCH', 'OIH', 'NCH'))
    return y + b[None, :, None]


def residual_conv_reference(x, params, n_blocks=3):
    for i in range(n_blocks):
        d = 3 ** i
        blk = _ref_leaky(x)
        blk = _ref_refpad(blk, d)
        blk = _ref_conv1d(blk, params['w3'][i], params['b3'][i], dilation=d)
        blk = _ref_bn(blk, params['g1'][i], params['be1'][i])
        blk = _ref_leaky(blk)
        blk = _ref_conv1d(blk, params['w1'][i], params['b1'][i])
        blk = _ref_bn(blk, params['g2'][i], params['be2'][i])
        sc = _ref_conv1d(x, params['ws'][i], params['bs'][i])
        sc = _ref_bn(sc, params['gs'][i], params['bes'][i])
        x = sc + blk
    return x


# ----------------------------------- main -----------------------------------

if __name__ == "__main__":
    N, C, L, n_blocks = 2, 8, 200, 3     # L=200 exercises the pad-to-256 path
    key = jax.random.PRNGKey(0)
    ks = jax.random.split(key, 13)

    params = {
        'w3': 0.2 * jax.random.normal(ks[0], (n_blocks, C, C, 3), jnp.float32),  # torch (O, I, K)
        'b3': 0.1 * jax.random.normal(ks[1], (n_blocks, C), jnp.float32),
        'w1': 0.2 * jax.random.normal(ks[2], (n_blocks, C, C, 1), jnp.float32),
        'b1': 0.1 * jax.random.normal(ks[3], (n_blocks, C), jnp.float32),
        'ws': 0.2 * jax.random.normal(ks[4], (n_blocks, C, C, 1), jnp.float32),
        'bs': 0.1 * jax.random.normal(ks[5], (n_blocks, C), jnp.float32),
        'g1': 1.0 + 0.1 * jax.random.normal(ks[6], (n_blocks, C), jnp.float32),
        'be1': 0.1 * jax.random.normal(ks[7], (n_blocks, C), jnp.float32),
        'g2': 1.0 + 0.1 * jax.random.normal(ks[8], (n_blocks, C), jnp.float32),
        'be2': 0.1 * jax.random.normal(ks[9], (n_blocks, C), jnp.float32),
        'gs': 1.0 + 0.1 * jax.random.normal(ks[10], (n_blocks, C), jnp.float32),
        'bes': 0.1 * jax.random.normal(ks[11], (n_blocks, C), jnp.float32),
    }
    x = jax.random.normal(ks[12], (N, C, L), jnp.float32)

    out = jax.block_until_ready(residual_conv_pallas(x, params, n_blocks))
    ref = jax.block_until_ready(residual_conv_reference(x, params, n_blocks))

    out_np, ref_np = np.asarray(out), np.asarray(ref)
    if not np.allclose(out_np, ref_np, atol=2e-3, rtol=2e-3):
        raise AssertionError(
            f"mismatch vs reference, max abs err = {float(np.max(np.abs(out_np - ref_np)))}")
    print("KERNEL_OK")
</pallas_src>

<mosaic_0001>
module attributes {stable_mosaic.version = 11 : i64} {
  func.func @kernel(%arg0: memref<16x256xf32, #tpu.memory_space<vmem>>, %arg1: memref<3x16x48xf32, #tpu.memory_space<vmem>>, %arg2: memref<3x16x16xf32, #tpu.memory_space<vmem>>, %arg3: memref<3x16x16xf32, #tpu.memory_space<vmem>>, %arg4: memref<9x8x1xf32, #tpu.memory_space<vmem>>, %arg5: memref<9x8x1xf32, #tpu.memory_space<vmem>>, %arg6: memref<16x256xf32, #tpu.memory_space<vmem>>) attributes {dimension_semantics = [], scalar_prefetch = 0 : i64, scratch_operands = 0 : i64, tpu.core_type = #tpu.core_type<tc>} {
    %0 = tpu.iota {dimensions = array<i32: 1>} : vector<1x256xi32>
    %c200_i32 = arith.constant 200 : i32
    %1 = vector.broadcast %c200_i32 : i32 to vector<1x256xi32>
    %2 = arith.cmpi slt, %0, %1 : vector<1x256xi32>
    %3 = arith.extui %2 : vector<1x256xi1> to vector<1x256xi32>
    %4 = arith.sitofp %3 : vector<1x256xi32> to vector<1x256xf32>
    %c0 = arith.constant 0 : index
    %c0_0 = arith.constant 0 : index
    %5 = vector.load %arg0[%c0, %c0_0] : memref<16x256xf32, #tpu.memory_space<vmem>>, vector<16x256xf32>
    %c0_1 = arith.constant 0 : index
    %c0_2 = arith.constant 0 : index
    %c0_3 = arith.constant 0 : index
    %6 = vector.load %arg3[%c0_1, %c0_2, %c0_3] : memref<3x16x16xf32, #tpu.memory_space<vmem>>, vector<1x16x16xf32>
    %7 = vector.shape_cast %6 : vector<1x16x16xf32> to vector<16x16xf32>
    %cst = arith.constant dense<0.000000e+00> : vector<16x256xf32>
    %8 = tpu.matmul %7, %5, %cst {dimension_numbers = #tpu.dot_dimension_numbers<[1], [0], [0], [1], [0, 0, 1, 1], [], []>} : vector<16x16xf32>, vector<16x256xf32>, vector<16x256xf32> -> vector<16x256xf32>
    %cst_4 = arith.constant 2.000000e-01 : f32
    %9 = vector.broadcast %cst_4 : f32 to vector<16x256xf32>
    %10 = arith.mulf %9, %5 : vector<16x256xf32>
    %11 = arith.maximumf %5, %10 : vector<16x256xf32>
    %12 = vector.extract_strided_slice %11 {offsets = [0, 1], sizes = [16, 1], strides = [1, 1]} : vector<16x256xf32> to vector<16x1xf32>
    %13 = vector.extract_strided_slice %11 {offsets = [0, 0], sizes = [16, 255], strides = [1, 1]} : vector<16x256xf32> to vector<16x255xf32>
    %14 = tpu.concatenate %12, %13 in 1 : vector<16x1xf32>, vector<16x255xf32> -> vector<16x256xf32>
    %15 = vector.extract_strided_slice %11 {offsets = [0, 198], sizes = [16, 1], strides = [1, 1]} : vector<16x256xf32> to vector<16x1xf32>
    %16 = vector.extract_strided_slice %11 {offsets = [0, 1], sizes = [16, 199], strides = [1, 1]} : vector<16x256xf32> to vector<16x199xf32>
    %17 = vector.extract_strided_slice %11 {offsets = [0, 200], sizes = [16, 56], strides = [1, 1]} : vector<16x256xf32> to vector<16x56xf32>
    %18 = tpu.concatenate %16, %15, %17 in 1 : vector<16x199xf32>, vector<16x1xf32>, vector<16x56xf32> -> vector<16x256xf32>
    %19 = tpu.concatenate %14, %11, %18 in 0 : vector<16x256xf32>, vector<16x256xf32>, vector<16x256xf32> -> vector<48x256xf32>
    %c0_5 = arith.constant 0 : index
    %c0_6 = arith.constant 0 : index
    %c0_7 = arith.constant 0 : index
    %20 = vector.load %arg1[%c0_5, %c0_6, %c0_7] : memref<3x16x48xf32, #tpu.memory_space<vmem>>, vector<1x16x48xf32>
    %21 = vector.shape_cast %20 : vector<1x16x48xf32> to vector<16x48xf32>
    %cst_8 = arith.constant dense<0.000000e+00> : vector<16x256xf32>
    %22 = tpu.matmul %21, %19, %cst_8 {dimension_numbers = #tpu.dot_dimension_numbers<[1], [0], [0], [1], [0, 0, 1, 1], [], []>} : vector<16x48xf32>, vector<48x256xf32>, vector<16x256xf32> -> vector<16x256xf32>
    %23 = vector.broadcast %4 : vector<1x256xf32> to vector<16x256xf32>
    %24 = arith.mulf %22, %23 : vector<16x256xf32>
    %cst_9 = arith.constant dense<0.000000e+00> : vector<16xf32>
    %25 = vector.multi_reduction <add>, %24, %cst_9 [1] : vector<16x256xf32> to vector<16xf32>
    %26 = vector.shape_cast %25 : vector<16xf32> to vector<16x1xf32>
    %27 = vector.extract_strided_slice %26 {offsets = [0, 0], sizes = [8, 1], strides = [1, 1]} : vector<16x1xf32> to vector<8x1xf32>
    %28 = vector.extract_strided_slice %26 {offsets = [8, 0], sizes = [8, 1], strides = [1, 1]} : vector<16x1xf32> to vector<8x1xf32>
    %29 = arith.addf %27, %28 : vector<8x1xf32>
    %30 = arith.mulf %24, %24 : vector<16x256xf32>
    %cst_10 = arith.constant dense<0.000000e+00> : vector<16xf32>
    %31 = vector.multi_reduction <add>, %30, %cst_10 [1] : vector<16x256xf32> to vector<16xf32>
    %32 = vector.shape_cast %31 : vector<16xf32> to vector<16x1xf32>
    %33 = vector.extract_strided_slice %32 {offsets = [0, 0], sizes = [8, 1], strides = [1, 1]} : vector<16x1xf32> to vector<8x1xf32>
    %34 = vector.extract_strided_slice %32 {offsets = [8, 0], sizes = [8, 1], strides = [1, 1]} : vector<16x1xf32> to vector<8x1xf32>
    %35 = arith.addf %33, %34 : vector<8x1xf32>
    %cst_11 = arith.constant 2.500000e-03 : f32
    %36 = vector.broadcast %cst_11 : f32 to vector<8x1xf32>
    %37 = arith.mulf %29, %36 : vector<8x1xf32>
    %cst_12 = arith.constant 2.500000e-03 : f32
    %38 = vector.broadcast %cst_12 : f32 to vector<8x1xf32>
    %39 = arith.mulf %35, %38 : vector<8x1xf32>
    %40 = arith.mulf %37, %37 : vector<8x1xf32>
    %41 = arith.subf %39, %40 : vector<8x1xf32>
    %c0_13 = arith.constant 0 : index
    %c0_14 = arith.constant 0 : index
    %c0_15 = arith.constant 0 : index
    %42 = vector.load %arg4[%c0_13, %c0_14, %c0_15] : memref<9x8x1xf32, #tpu.memory_space<vmem>>, vector<1x8x1xf32>
    %43 = vector.shape_cast %42 : vector<1x8x1xf32> to vector<8x1xf32>
    %cst_16 = arith.constant 9.99999974E-6 : f32
    %44 = vector.broadcast %cst_16 : f32 to vector<8x1xf32>
    %45 = arith.addf %41, %44 : vector<8x1xf32>
    %46 = math.rsqrt %45 : vector<8x1xf32>
    %47 = arith.mulf %43, %46 : vector<8x1xf32>
    %c0_17 = arith.constant 0 : index
    %c0_18 = arith.constant 0 : index
    %c0_19 = arith.constant 0 : index
    %48 = vector.load %arg5[%c0_17, %c0_18, %c0_19] : memref<9x8x1xf32, #tpu.memory_space<vmem>>, vector<1x8x1xf32>
    %49 = vector.shape_cast %48 : vector<1x8x1xf32> to vector<8x1xf32>
    %50 = arith.mulf %37, %47 : vector<8x1xf32>
    %51 = arith.subf %49, %50 : vector<8x1xf32>
    %52 = tpu.concatenate %47, %47 in 0 : vector<8x1xf32>, vector<8x1xf32> -> vector<16x1xf32>
    %53 = tpu.concatenate %51, %51 in 0 : vector<8x1xf32>, vector<8x1xf32> -> vector<16x1xf32>
    %54 = vector.broadcast %52 : vector<16x1xf32> to vector<16x256xf32>
    %55 = arith.mulf %22, %54 : vector<16x256xf32>
    %56 = vector.broadcast %53 : vector<16x1xf32> to vector<16x256xf32>
    %57 = arith.addf %55, %56 : vector<16x256xf32>
    %cst_20 = arith.constant 2.000000e-01 : f32
    %58 = vector.broadcast %cst_20 : f32 to vector<16x256xf32>
    %59 = arith.mulf %58, %57 : vector<16x256xf32>
    %60 = arith.maximumf %57, %59 : vector<16x256xf32>
    %c0_21 = arith.constant 0 : index
    %c0_22 = arith.constant 0 : index
    %c0_23 = arith.constant 0 : index
    %61 = vector.load %arg2[%c0_21, %c0_22, %c0_23] : memref<3x16x16xf32, #tpu.memory_space<vmem>>, vector<1x16x16xf32>
    %62 = vector.shape_cast %61 : vector<1x16x16xf32> to vector<16x16xf32>
    %cst_24 = arith.constant dense<0.000000e+00> : vector<16x256xf32>
    %63 = tpu.matmul %62, %60, %cst_24 {dimension_numbers = #tpu.dot_dimension_numbers<[1], [0], [0], [1], [0, 0, 1, 1], [], []>} : vector<16x16xf32>, vector<16x256xf32>, vector<16x256xf32> -> vector<16x256xf32>
    %64 = vector.broadcast %4 : vector<1x256xf32> to vector<16x256xf32>
    %65 = arith.mulf %63, %64 : vector<16x256xf32>
    %cst_25 = arith.constant dense<0.000000e+00> : vector<16xf32>
    %66 = vector.multi_reduction <add>, %65, %cst_25 [1] : vector<16x256xf32> to vector<16xf32>
    %67 = vector.shape_cast %66 : vector<16xf32> to vector<16x1xf32>
    %68 = vector.extract_strided_slice %67 {offsets = [0, 0], sizes = [8, 1], strides = [1, 1]} : vector<16x1xf32> to vector<8x1xf32>
    %69 = vector.extract_strided_slice %67 {offsets = [8, 0], sizes = [8, 1], strides = [1, 1]} : vector<16x1xf32> to vector<8x1xf32>
    %70 = arith.addf %68, %69 : vector<8x1xf32>
    %71 = arith.mulf %65, %65 : vector<16x256xf32>
    %cst_26 = arith.constant dense<0.000000e+00> : vector<16xf32>
    %72 = vector.multi_reduction <add>, %71, %cst_26 [1] : vector<16x256xf32> to vector<16xf32>
    %73 = vector.shape_cast %72 : vector<16xf32> to vector<16x1xf32>
    %74 = vector.extract_strided_slice %73 {offsets = [0, 0], sizes = [8, 1], strides = [1, 1]} : vector<16x1xf32> to vector<8x1xf32>
    %75 = vector.extract_strided_slice %73 {offsets = [8, 0], sizes = [8, 1], strides = [1, 1]} : vector<16x1xf32> to vector<8x1xf32>
    %76 = arith.addf %74, %75 : vector<8x1xf32>
    %cst_27 = arith.constant 2.500000e-03 : f32
    %77 = vector.broadcast %cst_27 : f32 to vector<8x1xf32>
    %78 = arith.mulf %70, %77 : vector<8x1xf32>
    %cst_28 = arith.constant 2.500000e-03 : f32
    %79 = vector.broadcast %cst_28 : f32 to vector<8x1xf32>
    %80 = arith.mulf %76, %79 : vector<8x1xf32>
    %81 = arith.mulf %78, %78 : vector<8x1xf32>
    %82 = arith.subf %80, %81 : vector<8x1xf32>
    %c1 = arith.constant 1 : index
    %c0_29 = arith.constant 0 : index
    %c0_30 = arith.constant 0 : index
    %83 = vector.load %arg4[%c1, %c0_29, %c0_30] : memref<9x8x1xf32, #tpu.memory_space<vmem>>, vector<1x8x1xf32>
    %84 = vector.shape_cast %83 : vector<1x8x1xf32> to vector<8x1xf32>
    %cst_31 = arith.constant 9.99999974E-6 : f32
    %85 = vector.broadcast %cst_31 : f32 to vector<8x1xf32>
    %86 = arith.addf %82, %85 : vector<8x1xf32>
    %87 = math.rsqrt %86 : vector<8x1xf32>
    %88 = arith.mulf %84, %87 : vector<8x1xf32>
    %c1_32 = arith.constant 1 : index
    %c0_33 = arith.constant 0 : index
    %c0_34 = arith.constant 0 : index
    %89 = vector.load %arg5[%c1_32, %c0_33, %c0_34] : memref<9x8x1xf32, #tpu.memory_space<vmem>>, vector<1x8x1xf32>
    %90 = vector.shape_cast %89 : vector<1x8x1xf32> to vector<8x1xf32>
    %91 = arith.mulf %78, %88 : vector<8x1xf32>
    %92 = arith.subf %90, %91 : vector<8x1xf32>
    %93 = tpu.concatenate %88, %88 in 0 : vector<8x1xf32>, vector<8x1xf32> -> vector<16x1xf32>
    %94 = tpu.concatenate %92, %92 in 0 : vector<8x1xf32>, vector<8x1xf32> -> vector<16x1xf32>
    %95 = vector.broadcast %4 : vector<1x256xf32> to vector<16x256xf32>
    %96 = arith.mulf %8, %95 : vector<16x256xf32>
    %cst_35 = arith.constant dense<0.000000e+00> : vector<16xf32>
    %97 = vector.multi_reduction <add>, %96, %cst_35 [1] : vector<16x256xf32> to vector<16xf32>
    %98 = vector.shape_cast %97 : vector<16xf32> to vector<16x1xf32>
    %99 = vector.extract_strided_slice %98 {offsets = [0, 0], sizes = [8, 1], strides = [1, 1]} : vector<16x1xf32> to vector<8x1xf32>
    %100 = vector.extract_strided_slice %98 {offsets = [8, 0], sizes = [8, 1], strides = [1, 1]} : vector<16x1xf32> to vector<8x1xf32>
    %101 = arith.addf %99, %100 : vector<8x1xf32>
    %102 = arith.mulf %96, %96 : vector<16x256xf32>
    %cst_36 = arith.constant dense<0.000000e+00> : vector<16xf32>
    %103 = vector.multi_reduction <add>, %102, %cst_36 [1] : vector<16x256xf32> to vector<16xf32>
    %104 = vector.shape_cast %103 : vector<16xf32> to vector<16x1xf32>
    %105 = vector.extract_strided_slice %104 {offsets = [0, 0], sizes = [8, 1], strides = [1, 1]} : vector<16x1xf32> to vector<8x1xf32>
    %106 = vector.extract_strided_slice %104 {offsets = [8, 0], sizes = [8, 1], strides = [1, 1]} : vector<16x1xf32> to vector<8x1xf32>
    %107 = arith.addf %105, %106 : vector<8x1xf32>
    %cst_37 = arith.constant 2.500000e-03 : f32
    %108 = vector.broadcast %cst_37 : f32 to vector<8x1xf32>
    %109 = arith.mulf %101, %108 : vector<8x1xf32>
    %cst_38 = arith.constant 2.500000e-03 : f32
    %110 = vector.broadcast %cst_38 : f32 to vector<8x1xf32>
    %111 = arith.mulf %107, %110 : vector<8x1xf32>
    %112 = arith.mulf %109, %109 : vector<8x1xf32>
    %113 = arith.subf %111, %112 : vector<8x1xf32>
    %c2 = arith.constant 2 : index
    %c0_39 = arith.constant 0 : index
    %c0_40 = arith.constant 0 : index
    %114 = vector.load %arg4[%c2, %c0_39, %c0_40] : memref<9x8x1xf32, #tpu.memory_space<vmem>>, vector<1x8x1xf32>
    %115 = vector.shape_cast %114 : vector<1x8x1xf32> to vector<8x1xf32>
    %cst_41 = arith.constant 9.99999974E-6 : f32
    %116 = vector.broadcast %cst_41 : f32 to vector<8x1xf32>
    %117 = arith.addf %113, %116 : vector<8x1xf32>
    %118 = math.rsqrt %117 : vector<8x1xf32>
    %119 = arith.mulf %115, %118 : vector<8x1xf32>
    %c2_42 = arith.constant 2 : index
    %c0_43 = arith.constant 0 : index
    %c0_44 = arith.constant 0 : index
    %120 = vector.load %arg5[%c2_42, %c0_43, %c0_44] : memref<9x8x1xf32, #tpu.memory_space<vmem>>, vector<1x8x1xf32>
    %121 = vector.shape_cast %120 : vector<1x8x1xf32> to vector<8x1xf32>
    %122 = arith.mulf %109, %119 : vector<8x1xf32>
    %123 = arith.subf %121, %122 : vector<8x1xf32>
    %124 = tpu.concatenate %119, %119 in 0 : vector<8x1xf32>, vector<8x1xf32> -> vector<16x1xf32>
    %125 = tpu.concatenate %123, %123 in 0 : vector<8x1xf32>, vector<8x1xf32> -> vector<16x1xf32>
    %126 = vector.broadcast %93 : vector<16x1xf32> to vector<16x256xf32>
    %127 = arith.mulf %63, %126 : vector<16x256xf32>
    %128 = vector.broadcast %124 : vector<16x1xf32> to vector<16x256xf32>
    %129 = arith.mulf %8, %128 : vector<16x256xf32>
    %130 = arith.addf %127, %129 : vector<16x256xf32>
    %131 = arith.addf %94, %125 : vector<16x1xf32>
    %132 = vector.broadcast %131 : vector<16x1xf32> to vector<16x256xf32>
    %133 = arith.addf %130, %132 : vector<16x256xf32>
    %c1_45 = arith.constant 1 : index
    %c0_46 = arith.constant 0 : index
    %c0_47 = arith.constant 0 : index
    %134 = vector.load %arg3[%c1_45, %c0_46, %c0_47] : memref<3x16x16xf32, #tpu.memory_space<vmem>>, vector<1x16x16xf32>
    %135 = vector.shape_cast %134 : vector<1x16x16xf32> to vector<16x16xf32>
    %cst_48 = arith.constant dense<0.000000e+00> : vector<16x256xf32>
    %136 = tpu.matmul %135, %133, %cst_48 {dimension_numbers = #tpu.dot_dimension_numbers<[1], [0], [0], [1], [0, 0, 1, 1], [], []>} : vector<16x16xf32>, vector<16x256xf32>, vector<16x256xf32> -> vector<16x256xf32>
    %cst_49 = arith.constant 2.000000e-01 : f32
    %137 = vector.broadcast %cst_49 : f32 to vector<16x256xf32>
    %138 = arith.mulf %137, %133 : vector<16x256xf32>
    %139 = arith.maximumf %133, %138 : vector<16x256xf32>
    %140 = vector.extract_strided_slice %139 {offsets = [0, 3], sizes = [16, 1], strides = [1, 1]} : vector<16x256xf32> to vector<16x1xf32>
    %141 = vector.extract_strided_slice %139 {offsets = [0, 2], sizes = [16, 1], strides = [1, 1]} : vector<16x256xf32> to vector<16x1xf32>
    %142 = vector.extract_strided_slice %139 {offsets = [0, 1], sizes = [16, 1], strides = [1, 1]} : vector<16x256xf32> to vector<16x1xf32>
    %143 = vector.extract_strided_slice %139 {offsets = [0, 0], sizes = [16, 253], strides = [1, 1]} : vector<16x256xf32> to vector<16x253xf32>
    %144 = tpu.concatenate %140, %141, %142, %143 in 1 : vector<16x1xf32>, vector<16x1xf32>, vector<16x1xf32>, vector<16x253xf32> -> vector<16x256xf32>
    %145 = vector.extract_strided_slice %139 {offsets = [0, 198], sizes = [16, 1], strides = [1, 1]} : vector<16x256xf32> to vector<16x1xf32>
    %146 = vector.extract_strided_slice %139 {offsets = [0, 197], sizes = [16, 1], strides = [1, 1]} : vector<16x256xf32> to vector<16x1xf32>
    %147 = vector.extract_strided_slice %139 {offsets = [0, 196], sizes = [16, 1], strides = [1, 1]} : vector<16x256xf32> to vector<16x1xf32>
    %148 = vector.extract_strided_slice %139 {offsets = [0, 3], sizes = [16, 197], strides = [1, 1]} : vector<16x256xf32> to vector<16x197xf32>
    %149 = vector.extract_strided_slice %139 {offsets = [0, 200], sizes = [16, 56], strides = [1, 1]} : vector<16x256xf32> to vector<16x56xf32>
    %150 = tpu.concatenate %148, %145, %146, %147, %149 in 1 : vector<16x197xf32>, vector<16x1xf32>, vector<16x1xf32>, vector<16x1xf32>, vector<16x56xf32> -> vector<16x256xf32>
    %151 = tpu.concatenate %144, %139, %150 in 0 : vector<16x256xf32>, vector<16x256xf32>, vector<16x256xf32> -> vector<48x256xf32>
    %c1_50 = arith.constant 1 : index
    %c0_51 = arith.constant 0 : index
    %c0_52 = arith.constant 0 : index
    %152 = vector.load %arg1[%c1_50, %c0_51, %c0_52] : memref<3x16x48xf32, #tpu.memory_space<vmem>>, vector<1x16x48xf32>
    %153 = vector.shape_cast %152 : vector<1x16x48xf32> to vector<16x48xf32>
    %cst_53 = arith.constant dense<0.000000e+00> : vector<16x256xf32>
    %154 = tpu.matmul %153, %151, %cst_53 {dimension_numbers = #tpu.dot_dimension_numbers<[1], [0], [0], [1], [0, 0, 1, 1], [], []>} : vector<16x48xf32>, vector<48x256xf32>, vector<16x256xf32> -> vector<16x256xf32>
    %155 = vector.broadcast %4 : vector<1x256xf32> to vector<16x256xf32>
    %156 = arith.mulf %154, %155 : vector<16x256xf32>
    %cst_54 = arith.constant dense<0.000000e+00> : vector<16xf32>
    %157 = vector.multi_reduction <add>, %156, %cst_54 [1] : vector<16x256xf32> to vector<16xf32>
    %158 = vector.shape_cast %157 : vector<16xf32> to vector<16x1xf32>
    %159 = vector.extract_strided_slice %158 {offsets = [0, 0], sizes = [8, 1], strides = [1, 1]} : vector<16x1xf32> to vector<8x1xf32>
    %160 = vector.extract_strided_slice %158 {offsets = [8, 0], sizes = [8, 1], strides = [1, 1]} : vector<16x1xf32> to vector<8x1xf32>
    %161 = arith.addf %159, %160 : vector<8x1xf32>
    %162 = arith.mulf %156, %156 : vector<16x256xf32>
    %cst_55 = arith.constant dense<0.000000e+00> : vector<16xf32>
    %163 = vector.multi_reduction <add>, %162, %cst_55 [1] : vector<16x256xf32> to vector<16xf32>
    %164 = vector.shape_cast %163 : vector<16xf32> to vector<16x1xf32>
    %165 = vector.extract_strided_slice %164 {offsets = [0, 0], sizes = [8, 1], strides = [1, 1]} : vector<16x1xf32> to vector<8x1xf32>
    %166 = vector.extract_strided_slice %164 {offsets = [8, 0], sizes = [8, 1], strides = [1, 1]} : vector<16x1xf32> to vector<8x1xf32>
    %167 = arith.addf %165, %166 : vector<8x1xf32>
    %cst_56 = arith.constant 2.500000e-03 : f32
    %168 = vector.broadcast %cst_56 : f32 to vector<8x1xf32>
    %169 = arith.mulf %161, %168 : vector<8x1xf32>
    %cst_57 = arith.constant 2.500000e-03 : f32
    %170 = vector.broadcast %cst_57 : f32 to vector<8x1xf32>
    %171 = arith.mulf %167, %170 : vector<8x1xf32>
    %172 = arith.mulf %169, %169 : vector<8x1xf32>
    %173 = arith.subf %171, %172 : vector<8x1xf32>
    %c3 = arith.constant 3 : index
    %c0_58 = arith.constant 0 : index
    %c0_59 = arith.constant 0 : index
    %174 = vector.load %arg4[%c3, %c0_58, %c0_59] : memref<9x8x1xf32, #tpu.memory_space<vmem>>, vector<1x8x1xf32>
    %175 = vector.shape_cast %174 : vector<1x8x1xf32> to vector<8x1xf32>
    %cst_60 = arith.constant 9.99999974E-6 : f32
    %176 = vector.broadcast %cst_60 : f32 to vector<8x1xf32>
    %177 = arith.addf %173, %176 : vector<8x1xf32>
    %178 = math.rsqrt %177 : vector<8x1xf32>
    %179 = arith.mulf %175, %178 : vector<8x1xf32>
    %c3_61 = arith.constant 3 : index
    %c0_62 = arith.constant 0 : index
    %c0_63 = arith.constant 0 : index
    %180 = vector.load %arg5[%c3_61, %c0_62, %c0_63] : memref<9x8x1xf32, #tpu.memory_space<vmem>>, vector<1x8x1xf32>
    %181 = vector.shape_cast %180 : vector<1x8x1xf32> to vector<8x1xf32>
    %182 = arith.mulf %169, %179 : vector<8x1xf32>
    %183 = arith.subf %181, %182 : vector<8x1xf32>
    %184 = tpu.concatenate %179, %179 in 0 : vector<8x1xf32>, vector<8x1xf32> -> vector<16x1xf32>
    %185 = tpu.concatenate %183, %183 in 0 : vector<8x1xf32>, vector<8x1xf32> -> vector<16x1xf32>
    %186 = vector.broadcast %184 : vector<16x1xf32> to vector<16x256xf32>
    %187 = arith.mulf %154, %186 : vector<16x256xf32>
    %188 = vector.broadcast %185 : vector<16x1xf32> to vector<16x256xf32>
    %189 = arith.addf %187, %188 : vector<16x256xf32>
    %cst_64 = arith.constant 2.000000e-01 : f32
    %190 = vector.broadcast %cst_64 : f32 to vector<16x256xf32>
    %191 = arith.mulf %190, %189 : vector<16x256xf32>
    %192 = arith.maximumf %189, %191 : vector<16x256xf32>
    %c1_65 = arith.constant 1 : index
    %c0_66 = arith.constant 0 : index
    %c0_67 = arith.constant 0 : index
    %193 = vector.load %arg2[%c1_65, %c0_66, %c0_67] : memref<3x16x16xf32, #tpu.memory_space<vmem>>, vector<1x16x16xf32>
    %194 = vector.shape_cast %193 : vector<1x16x16xf32> to vector<16x16xf32>
    %cst_68 = arith.constant dense<0.000000e+00> : vector<16x256xf32>
    %195 = tpu.matmul %194, %192, %cst_68 {dimension_numbers = #tpu.dot_dimension_numbers<[1], [0], [0], [1], [0, 0, 1, 1], [], []>} : vector<16x16xf32>, vector<16x256xf32>, vector<16x256xf32> -> vector<16x256xf32>
    %196 = vector.broadcast %4 : vector<1x256xf32> to vector<16x256xf32>
    %197 = arith.mulf %195, %196 : vector<16x256xf32>
    %cst_69 = arith.constant dense<0.000000e+00> : vector<16xf32>
    %198 = vector.multi_reduction <add>, %197, %cst_69 [1] : vector<16x256xf32> to vector<16xf32>
    %199 = vector.shape_cast %198 : vector<16xf32> to vector<16x1xf32>
    %200 = vector.extract_strided_slice %199 {offsets = [0, 0], sizes = [8, 1], strides = [1, 1]} : vector<16x1xf32> to vector<8x1xf32>
    %201 = vector.extract_strided_slice %199 {offsets = [8, 0], sizes = [8, 1], strides = [1, 1]} : vector<16x1xf32> to vector<8x1xf32>
    %202 = arith.addf %200, %201 : vector<8x1xf32>
    %203 = arith.mulf %197, %197 : vector<16x256xf32>
    %cst_70 = arith.constant dense<0.000000e+00> : vector<16xf32>
    %204 = vector.multi_reduction <add>, %203, %cst_70 [1] : vector<16x256xf32> to vector<16xf32>
    %205 = vector.shape_cast %204 : vector<16xf32> to vector<16x1xf32>
    %206 = vector.extract_strided_slice %205 {offsets = [0, 0], sizes = [8, 1], strides = [1, 1]} : vector<16x1xf32> to vector<8x1xf32>
    %207 = vector.extract_strided_slice %205 {offsets = [8, 0], sizes = [8, 1], strides = [1, 1]} : vector<16x1xf32> to vector<8x1xf32>
    %208 = arith.addf %206, %207 : vector<8x1xf32>
    %cst_71 = arith.constant 2.500000e-03 : f32
    %209 = vector.broadcast %cst_71 : f32 to vector<8x1xf32>
    %210 = arith.mulf %202, %209 : vector<8x1xf32>
    %cst_72 = arith.constant 2.500000e-03 : f32
    %211 = vector.broadcast %cst_72 : f32 to vector<8x1xf32>
    %212 = arith.mulf %208, %211 : vector<8x1xf32>
    %213 = arith.mulf %210, %210 : vector<8x1xf32>
    %214 = arith.subf %212, %213 : vector<8x1xf32>
    %c4 = arith.constant 4 : index
    %c0_73 = arith.constant 0 : index
    %c0_74 = arith.constant 0 : index
    %215 = vector.load %arg4[%c4, %c0_73, %c0_74] : memref<9x8x1xf32, #tpu.memory_space<vmem>>, vector<1x8x1xf32>
    %216 = vector.shape_cast %215 : vector<1x8x1xf32> to vector<8x1xf32>
    %cst_75 = arith.constant 9.99999974E-6 : f32
    %217 = vector.broadcast %cst_75 : f32 to vector<8x1xf32>
    %218 = arith.addf %214, %217 : vector<8x1xf32>
    %219 = math.rsqrt %218 : vector<8x1xf32>
    %220 = arith.mulf %216, %219 : vector<8x1xf32>
    %c4_76 = arith.constant 4 : index
    %c0_77 = arith.constant 0 : index
    %c0_78 = arith.constant 0 : index
    %221 = vector.load %arg5[%c4_76, %c0_77, %c0_78] : memref<9x8x1xf32, #tpu.memory_space<vmem>>, vector<1x8x1xf32>
    %222 = vector.shape_cast %221 : vector<1x8x1xf32> to vector<8x1xf32>
    %223 = arith.mulf %210, %220 : vector<8x1xf32>
    %224 = arith.subf %222, %223 : vector<8x1xf32>
    %225 = tpu.concatenate %220, %220 in 0 : vector<8x1xf32>, vector<8x1xf32> -> vector<16x1xf32>
    %226 = tpu.concatenate %224, %224 in 0 : vector<8x1xf32>, vector<8x1xf32> -> vector<16x1xf32>
    %227 = vector.broadcast %4 : vector<1x256xf32> to vector<16x256xf32>
    %228 = arith.mulf %136, %227 : vector<16x256xf32>
    %cst_79 = arith.constant dense<0.000000e+00> : vector<16xf32>
    %229 = vector.multi_reduction <add>, %228, %cst_79 [1] : vector<16x256xf32> to vector<16xf32>
    %230 = vector.shape_cast %229 : vector<16xf32> to vector<16x1xf32>
    %231 = vector.extract_strided_slice %230 {offsets = [0, 0], sizes = [8, 1], strides = [1, 1]} : vector<16x1xf32> to vector<8x1xf32>
    %232 = vector.extract_strided_slice %230 {offsets = [8, 0], sizes = [8, 1], strides = [1, 1]} : vector<16x1xf32> to vector<8x1xf32>
    %233 = arith.addf %231, %232 : vector<8x1xf32>
    %234 = arith.mulf %228, %228 : vector<16x256xf32>
    %cst_80 = arith.constant dense<0.000000e+00> : vector<16xf32>
    %235 = vector.multi_reduction <add>, %234, %cst_80 [1] : vector<16x256xf32> to vector<16xf32>
    %236 = vector.shape_cast %235 : vector<16xf32> to vector<16x1xf32>
    %237 = vector.extract_strided_slice %236 {offsets = [0, 0], sizes = [8, 1], strides = [1, 1]} : vector<16x1xf32> to vector<8x1xf32>
    %238 = vector.extract_strided_slice %236 {offsets = [8, 0], sizes = [8, 1], strides = [1, 1]} : vector<16x1xf32> to vector<8x1xf32>
    %239 = arith.addf %237, %238 : vector<8x1xf32>
    %cst_81 = arith.constant 2.500000e-03 : f32
    %240 = vector.broadcast %cst_81 : f32 to vector<8x1xf32>
    %241 = arith.mulf %233, %240 : vector<8x1xf32>
    %cst_82 = arith.constant 2.500000e-03 : f32
    %242 = vector.broadcast %cst_82 : f32 to vector<8x1xf32>
    %243 = arith.mulf %239, %242 : vector<8x1xf32>
    %244 = arith.mulf %241, %241 : vector<8x1xf32>
    %245 = arith.subf %243, %244 : vector<8x1xf32>
    %c5 = arith.constant 5 : index
    %c0_83 = arith.constant 0 : index
    %c0_84 = arith.constant 0 : index
    %246 = vector.load %arg4[%c5, %c0_83, %c0_84] : memref<9x8x1xf32, #tpu.memory_space<vmem>>, vector<1x8x1xf32>
    %247 = vector.shape_cast %246 : vector<1x8x1xf32> to vector<8x1xf32>
    %cst_85 = arith.constant 9.99999974E-6 : f32
    %248 = vector.broadcast %cst_85 : f32 to vector<8x1xf32>
    %249 = arith.addf %245, %248 : vector<8x1xf32>
    %250 = math.rsqrt %249 : vector<8x1xf32>
    %251 = arith.mulf %247, %250 : vector<8x1xf32>
    %c5_86 = arith.constant 5 : index
    %c0_87 = arith.constant 0 : index
    %c0_88 = arith.constant 0 : index
    %252 = vector.load %arg5[%c5_86, %c0_87, %c0_88] : memref<9x8x1xf32, #tpu.memory_space<vmem>>, vector<1x8x1xf32>
    %253 = vector.shape_cast %252 : vector<1x8x1xf32> to vector<8x1xf32>
    %254 = arith.mulf %241, %251 : vector<8x1xf32>
    %255 = arith.subf %253, %254 : vector<8x1xf32>
    %256 = tpu.concatenate %251, %251 in 0 : vector<8x1xf32>, vector<8x1xf32> -> vector<16x1xf32>
    %257 = tpu.concatenate %255, %255 in 0 : vector<8x1xf32>, vector<8x1xf32> -> vector<16x1xf32>
    %258 = vector.broadcast %225 : vector<16x1xf32> to vector<16x256xf32>
    %259 = arith.mulf %195, %258 : vector<16x256xf32>
    %260 = vector.broadcast %256 : vector<16x1xf32> to vector<16x256xf32>
    %261 = arith.mulf %136, %260 : vector<16x256xf32>
    %262 = arith.addf %259, %261 : vector<16x256xf32>
    %263 = arith.addf %226, %257 : vector<16x1xf32>
    %264 = vector.broadcast %263 : vector<16x1xf32> to vector<16x256xf32>
    %265 = arith.addf %262, %264 : vector<16x256xf32>
    %c2_89 = arith.constant 2 : index
    %c0_90 = arith.constant 0 : index
    %c0_91 = arith.constant 0 : index
    %266 = vector.load %arg3[%c2_89, %c0_90, %c0_91] : memref<3x16x16xf32, #tpu.memory_space<vmem>>, vector<1x16x16xf32>
    %267 = vector.shape_cast %266 : vector<1x16x16xf32> to vector<16x16xf32>
    %cst_92 = arith.constant dense<0.000000e+00> : vector<16x256xf32>
    %268 = tpu.matmul %267, %265, %cst_92 {dimension_numbers = #tpu.dot_dimension_numbers<[1], [0], [0], [1], [0, 0, 1, 1], [], []>} : vector<16x16xf32>, vector<16x256xf32>, vector<16x256xf32> -> vector<16x256xf32>
    %cst_93 = arith.constant 2.000000e-01 : f32
    %269 = vector.broadcast %cst_93 : f32 to vector<16x256xf32>
    %270 = arith.mulf %269, %265 : vector<16x256xf32>
    %271 = arith.maximumf %265, %270 : vector<16x256xf32>
    %272 = vector.extract_strided_slice %271 {offsets = [0, 9], sizes = [16, 1], strides = [1, 1]} : vector<16x256xf32> to vector<16x1xf32>
    %273 = vector.extract_strided_slice %271 {offsets = [0, 8], sizes = [16, 1], strides = [1, 1]} : vector<16x256xf32> to vector<16x1xf32>
    %274 = vector.extract_strided_slice %271 {offsets = [0, 7], sizes = [16, 1], strides = [1, 1]} : vector<16x256xf32> to vector<16x1xf32>
    %275 = vector.extract_strided_slice %271 {offsets = [0, 6], sizes = [16, 1], strides = [1, 1]} : vector<16x256xf32> to vector<16x1xf32>
    %276 = vector.extract_strided_slice %271 {offsets = [0, 5], sizes = [16, 1], strides = [1, 1]} : vector<16x256xf32> to vector<16x1xf32>
    %277 = vector.extract_strided_slice %271 {offsets = [0, 4], sizes = [16, 1], strides = [1, 1]} : vector<16x256xf32> to vector<16x1xf32>
    %278 = vector.extract_strided_slice %271 {offsets = [0, 3], sizes = [16, 1], strides = [1, 1]} : vector<16x256xf32> to vector<16x1xf32>
    %279 = vector.extract_strided_slice %271 {offsets = [0, 2], sizes = [16, 1], strides = [1, 1]} : vector<16x256xf32> to vector<16x1xf32>
    %280 = vector.extract_strided_slice %271 {offsets = [0, 1], sizes = [16, 1], strides = [1, 1]} : vector<16x256xf32> to vector<16x1xf32>
    %281 = vector.extract_strided_slice %271 {offsets = [0, 0], sizes = [16, 247], strides = [1, 1]} : vector<16x256xf32> to vector<16x247xf32>
    %282 = tpu.concatenate %272, %273, %274, %275, %276, %277, %278, %279, %280, %281 in 1 : vector<16x1xf32>, vector<16x1xf32>, vector<16x1xf32>, vector<16x1xf32>, vector<16x1xf32>, vector<16x1xf32>, vector<16x1xf32>, vector<16x1xf32>, vector<16x1xf32>, vector<16x247xf32> -> vector<16x256xf32>
    %283 = vector.extract_strided_slice %271 {offsets = [0, 198], sizes = [16, 1], strides = [1, 1]} : vector<16x256xf32> to vector<16x1xf32>
    %284 = vector.extract_strided_slice %271 {offsets = [0, 197], sizes = [16, 1], strides = [1, 1]} : vector<16x256xf32> to vector<16x1xf32>
    %285 = vector.extract_strided_slice %271 {offsets = [0, 196], sizes = [16, 1], strides = [1, 1]} : vector<16x256xf32> to vector<16x1xf32>
    %286 = vector.extract_strided_slice %271 {offsets = [0, 195], sizes = [16, 1], strides = [1, 1]} : vector<16x256xf32> to vector<16x1xf32>
    %287 = vector.extract_strided_slice %271 {offsets = [0, 194], sizes = [16, 1], strides = [1, 1]} : vector<16x256xf32> to vector<16x1xf32>
    %288 = vector.extract_strided_slice %271 {offsets = [0, 193], sizes = [16, 1], strides = [1, 1]} : vector<16x256xf32> to vector<16x1xf32>
    %289 = vector.extract_strided_slice %271 {offsets = [0, 192], sizes = [16, 1], strides = [1, 1]} : vector<16x256xf32> to vector<16x1xf32>
    %290 = vector.extract_strided_slice %271 {offsets = [0, 191], sizes = [16, 1], strides = [1, 1]} : vector<16x256xf32> to vector<16x1xf32>
    %291 = vector.extract_strided_slice %271 {offsets = [0, 190], sizes = [16, 1], strides = [1, 1]} : vector<16x256xf32> to vector<16x1xf32>
    %292 = vector.extract_strided_slice %271 {offsets = [0, 9], sizes = [16, 191], strides = [1, 1]} : vector<16x256xf32> to vector<16x191xf32>
    %293 = vector.extract_strided_slice %271 {offsets = [0, 200], sizes = [16, 56], strides = [1, 1]} : vector<16x256xf32> to vector<16x56xf32>
    %294 = tpu.concatenate %292, %283, %284, %285, %286, %287, %288, %289, %290, %291, %293 in 1 : vector<16x191xf32>, vector<16x1xf32>, vector<16x1xf32>, vector<16x1xf32>, vector<16x1xf32>, vector<16x1xf32>, vector<16x1xf32>, vector<16x1xf32>, vector<16x1xf32>, vector<16x1xf32>, vector<16x56xf32> -> vector<16x256xf32>
    %295 = tpu.concatenate %282, %271, %294 in 0 : vector<16x256xf32>, vector<16x256xf32>, vector<16x256xf32> -> vector<48x256xf32>
    %c2_94 = arith.constant 2 : index
    %c0_95 = arith.constant 0 : index
    %c0_96 = arith.constant 0 : index
    %296 = vector.load %arg1[%c2_94, %c0_95, %c0_96] : memref<3x16x48xf32, #tpu.memory_space<vmem>>, vector<1x16x48xf32>
    %297 = vector.shape_cast %296 : vector<1x16x48xf32> to vector<16x48xf32>
    %cst_97 = arith.constant dense<0.000000e+00> : vector<16x256xf32>
    %298 = tpu.matmul %297, %295, %cst_97 {dimension_numbers = #tpu.dot_dimension_numbers<[1], [0], [0], [1], [0, 0, 1, 1], [], []>} : vector<16x48xf32>, vector<48x256xf32>, vector<16x256xf32> -> vector<16x256xf32>
    %299 = vector.broadcast %4 : vector<1x256xf32> to vector<16x256xf32>
    %300 = arith.mulf %298, %299 : vector<16x256xf32>
    %cst_98 = arith.constant dense<0.000000e+00> : vector<16xf32>
    %301 = vector.multi_reduction <add>, %300, %cst_98 [1] : vector<16x256xf32> to vector<16xf32>
    %302 = vector.shape_cast %301 : vector<16xf32> to vector<16x1xf32>
    %303 = vector.extract_strided_slice %302 {offsets = [0, 0], sizes = [8, 1], strides = [1, 1]} : vector<16x1xf32> to vector<8x1xf32>
    %304 = vector.extract_strided_slice %302 {offsets = [8, 0], sizes = [8, 1], strides = [1, 1]} : vector<16x1xf32> to vector<8x1xf32>
    %305 = arith.addf %303, %304 : vector<8x1xf32>
    %306 = arith.mulf %300, %300 : vector<16x256xf32>
    %cst_99 = arith.constant dense<0.000000e+00> : vector<16xf32>
    %307 = vector.multi_reduction <add>, %306, %cst_99 [1] : vector<16x256xf32> to vector<16xf32>
    %308 = vector.shape_cast %307 : vector<16xf32> to vector<16x1xf32>
    %309 = vector.extract_strided_slice %308 {offsets = [0, 0], sizes = [8, 1], strides = [1, 1]} : vector<16x1xf32> to vector<8x1xf32>
    %310 = vector.extract_strided_slice %308 {offsets = [8, 0], sizes = [8, 1], strides = [1, 1]} : vector<16x1xf32> to vector<8x1xf32>
    %311 = arith.addf %309, %310 : vector<8x1xf32>
    %cst_100 = arith.constant 2.500000e-03 : f32
    %312 = vector.broadcast %cst_100 : f32 to vector<8x1xf32>
    %313 = arith.mulf %305, %312 : vector<8x1xf32>
    %cst_101 = arith.constant 2.500000e-03 : f32
    %314 = vector.broadcast %cst_101 : f32 to vector<8x1xf32>
    %315 = arith.mulf %311, %314 : vector<8x1xf32>
    %316 = arith.mulf %313, %313 : vector<8x1xf32>
    %317 = arith.subf %315, %316 : vector<8x1xf32>
    %c6 = arith.constant 6 : index
    %c0_102 = arith.constant 0 : index
    %c0_103 = arith.constant 0 : index
    %318 = vector.load %arg4[%c6, %c0_102, %c0_103] : memref<9x8x1xf32, #tpu.memory_space<vmem>>, vector<1x8x1xf32>
    %319 = vector.shape_cast %318 : vector<1x8x1xf32> to vector<8x1xf32>
    %cst_104 = arith.constant 9.99999974E-6 : f32
    %320 = vector.broadcast %cst_104 : f32 to vector<8x1xf32>
    %321 = arith.addf %317, %320 : vector<8x1xf32>
    %322 = math.rsqrt %321 : vector<8x1xf32>
    %323 = arith.mulf %319, %322 : vector<8x1xf32>
    %c6_105 = arith.constant 6 : index
    %c0_106 = arith.constant 0 : index
    %c0_107 = arith.constant 0 : index
    %324 = vector.load %arg5[%c6_105, %c0_106, %c0_107] : memref<9x8x1xf32, #tpu.memory_space<vmem>>, vector<1x8x1xf32>
    %325 = vector.shape_cast %324 : vector<1x8x1xf32> to vector<8x1xf32>
    %326 = arith.mulf %313, %323 : vector<8x1xf32>
    %327 = arith.subf %325, %326 : vector<8x1xf32>
    %328 = tpu.concatenate %323, %323 in 0 : vector<8x1xf32>, vector<8x1xf32> -> vector<16x1xf32>
    %329 = tpu.concatenate %327, %327 in 0 : vector<8x1xf32>, vector<8x1xf32> -> vector<16x1xf32>
    %330 = vector.broadcast %328 : vector<16x1xf32> to vector<16x256xf32>
    %331 = arith.mulf %298, %330 : vector<16x256xf32>
    %332 = vector.broadcast %329 : vector<16x1xf32> to vector<16x256xf32>
    %333 = arith.addf %331, %332 : vector<16x256xf32>
    %cst_108 = arith.constant 2.000000e-01 : f32
    %334 = vector.broadcast %cst_108 : f32 to vector<16x256xf32>
    %335 = arith.mulf %334, %333 : vector<16x256xf32>
    %336 = arith.maximumf %333, %335 : vector<16x256xf32>
    %c2_109 = arith.constant 2 : index
    %c0_110 = arith.constant 0 : index
    %c0_111 = arith.constant 0 : index
    %337 = vector.load %arg2[%c2_109, %c0_110, %c0_111] : memref<3x16x16xf32, #tpu.memory_space<vmem>>, vector<1x16x16xf32>
    %338 = vector.shape_cast %337 : vector<1x16x16xf32> to vector<16x16xf32>
    %cst_112 = arith.constant dense<0.000000e+00> : vector<16x256xf32>
    %339 = tpu.matmul %338, %336, %cst_112 {dimension_numbers = #tpu.dot_dimension_numbers<[1], [0], [0], [1], [0, 0, 1, 1], [], []>} : vector<16x16xf32>, vector<16x256xf32>, vector<16x256xf32> -> vector<16x256xf32>
    %340 = vector.broadcast %4 : vector<1x256xf32> to vector<16x256xf32>
    %341 = arith.mulf %339, %340 : vector<16x256xf32>
    %cst_113 = arith.constant dense<0.000000e+00> : vector<16xf32>
    %342 = vector.multi_reduction <add>, %341, %cst_113 [1] : vector<16x256xf32> to vector<16xf32>
    %343 = vector.shape_cast %342 : vector<16xf32> to vector<16x1xf32>
    %344 = vector.extract_strided_slice %343 {offsets = [0, 0], sizes = [8, 1], strides = [1, 1]} : vector<16x1xf32> to vector<8x1xf32>
    %345 = vector.extract_strided_slice %343 {offsets = [8, 0], sizes = [8, 1], strides = [1, 1]} : vector<16x1xf32> to vector<8x1xf32>
    %346 = arith.addf %344, %345 : vector<8x1xf32>
    %347 = arith.mulf %341, %341 : vector<16x256xf32>
    %cst_114 = arith.constant dense<0.000000e+00> : vector<16xf32>
    %348 = vector.multi_reduction <add>, %347, %cst_114 [1] : vector<16x256xf32> to vector<16xf32>
    %349 = vector.shape_cast %348 : vector<16xf32> to vector<16x1xf32>
    %350 = vector.extract_strided_slice %349 {offsets = [0, 0], sizes = [8, 1], strides = [1, 1]} : vector<16x1xf32> to vector<8x1xf32>
    %351 = vector.extract_strided_slice %349 {offsets = [8, 0], sizes = [8, 1], strides = [1, 1]} : vector<16x1xf32> to vector<8x1xf32>
    %352 = arith.addf %350, %351 : vector<8x1xf32>
    %cst_115 = arith.constant 2.500000e-03 : f32
    %353 = vector.broadcast %cst_115 : f32 to vector<8x1xf32>
    %354 = arith.mulf %346, %353 : vector<8x1xf32>
    %cst_116 = arith.constant 2.500000e-03 : f32
    %355 = vector.broadcast %cst_116 : f32 to vector<8x1xf32>
    %356 = arith.mulf %352, %355 : vector<8x1xf32>
    %357 = arith.mulf %354, %354 : vector<8x1xf32>
    %358 = arith.subf %356, %357 : vector<8x1xf32>
    %c7 = arith.constant 7 : index
    %c0_117 = arith.constant 0 : index
    %c0_118 = arith.constant 0 : index
    %359 = vector.load %arg4[%c7, %c0_117, %c0_118] : memref<9x8x1xf32, #tpu.memory_space<vmem>>, vector<1x8x1xf32>
    %360 = vector.shape_cast %359 : vector<1x8x1xf32> to vector<8x1xf32>
    %cst_119 = arith.constant 9.99999974E-6 : f32
    %361 = vector.broadcast %cst_119 : f32 to vector<8x1xf32>
    %362 = arith.addf %358, %361 : vector<8x1xf32>
    %363 = math.rsqrt %362 : vector<8x1xf32>
    %364 = arith.mulf %360, %363 : vector<8x1xf32>
    %c7_120 = arith.constant 7 : index
    %c0_121 = arith.constant 0 : index
    %c0_122 = arith.constant 0 : index
    %365 = vector.load %arg5[%c7_120, %c0_121, %c0_122] : memref<9x8x1xf32, #tpu.memory_space<vmem>>, vector<1x8x1xf32>
    %366 = vector.shape_cast %365 : vector<1x8x1xf32> to vector<8x1xf32>
    %367 = arith.mulf %354, %364 : vector<8x1xf32>
    %368 = arith.subf %366, %367 : vector<8x1xf32>
    %369 = tpu.concatenate %364, %364 in 0 : vector<8x1xf32>, vector<8x1xf32> -> vector<16x1xf32>
    %370 = tpu.concatenate %368, %368 in 0 : vector<8x1xf32>, vector<8x1xf32> -> vector<16x1xf32>
    %371 = vector.broadcast %4 : vector<1x256xf32> to vector<16x256xf32>
    %372 = arith.mulf %268, %371 : vector<16x256xf32>
    %cst_123 = arith.constant dense<0.000000e+00> : vector<16xf32>
    %373 = vector.multi_reduction <add>, %372, %cst_123 [1] : vector<16x256xf32> to vector<16xf32>
    %374 = vector.shape_cast %373 : vector<16xf32> to vector<16x1xf32>
    %375 = vector.extract_strided_slice %374 {offsets = [0, 0], sizes = [8, 1], strides = [1, 1]} : vector<16x1xf32> to vector<8x1xf32>
    %376 = vector.extract_strided_slice %374 {offsets = [8, 0], sizes = [8, 1], strides = [1, 1]} : vector<16x1xf32> to vector<8x1xf32>
    %377 = arith.addf %375, %376 : vector<8x1xf32>
    %378 = arith.mulf %372, %372 : vector<16x256xf32>
    %cst_124 = arith.constant dense<0.000000e+00> : vector<16xf32>
    %379 = vector.multi_reduction <add>, %378, %cst_124 [1] : vector<16x256xf32> to vector<16xf32>
    %380 = vector.shape_cast %379 : vector<16xf32> to vector<16x1xf32>
    %381 = vector.extract_strided_slice %380 {offsets = [0, 0], sizes = [8, 1], strides = [1, 1]} : vector<16x1xf32> to vector<8x1xf32>
    %382 = vector.extract_strided_slice %380 {offsets = [8, 0], sizes = [8, 1], strides = [1, 1]} : vector<16x1xf32> to vector<8x1xf32>
    %383 = arith.addf %381, %382 : vector<8x1xf32>
    %cst_125 = arith.constant 2.500000e-03 : f32
    %384 = vector.broadcast %cst_125 : f32 to vector<8x1xf32>
    %385 = arith.mulf %377, %384 : vector<8x1xf32>
    %cst_126 = arith.constant 2.500000e-03 : f32
    %386 = vector.broadcast %cst_126 : f32 to vector<8x1xf32>
    %387 = arith.mulf %383, %386 : vector<8x1xf32>
    %388 = arith.mulf %385, %385 : vector<8x1xf32>
    %389 = arith.subf %387, %388 : vector<8x1xf32>
    %c8 = arith.constant 8 : index
    %c0_127 = arith.constant 0 : index
    %c0_128 = arith.constant 0 : index
    %390 = vector.load %arg4[%c8, %c0_127, %c0_128] : memref<9x8x1xf32, #tpu.memory_space<vmem>>, vector<1x8x1xf32>
    %391 = vector.shape_cast %390 : vector<1x8x1xf32> to vector<8x1xf32>
    %cst_129 = arith.constant 9.99999974E-6 : f32
    %392 = vector.broadcast %cst_129 : f32 to vector<8x1xf32>
    %393 = arith.addf %389, %392 : vector<8x1xf32>
    %394 = math.rsqrt %393 : vector<8x1xf32>
    %395 = arith.mulf %391, %394 : vector<8x1xf32>
    %c8_130 = arith.constant 8 : index
    %c0_131 = arith.constant 0 : index
    %c0_132 = arith.constant 0 : index
    %396 = vector.load %arg5[%c8_130, %c0_131, %c0_132] : memref<9x8x1xf32, #tpu.memory_space<vmem>>, vector<1x8x1xf32>
    %397 = vector.shape_cast %396 : vector<1x8x1xf32> to vector<8x1xf32>
    %398 = arith.mulf %385, %395 : vector<8x1xf32>
    %399 = arith.subf %397, %398 : vector<8x1xf32>
    %400 = tpu.concatenate %395, %395 in 0 : vector<8x1xf32>, vector<8x1xf32> -> vector<16x1xf32>
    %401 = tpu.concatenate %399, %399 in 0 : vector<8x1xf32>, vector<8x1xf32> -> vector<16x1xf32>
    %402 = vector.broadcast %369 : vector<16x1xf32> to vector<16x256xf32>
    %403 = arith.mulf %339, %402 : vector<16x256xf32>
    %404 = vector.broadcast %400 : vector<16x1xf32> to vector<16x256xf32>
    %405 = arith.mulf %268, %404 : vector<16x256xf32>
    %406 = arith.addf %403, %405 : vector<16x256xf32>
    %407 = arith.addf %370, %401 : vector<16x1xf32>
    %408 = vector.broadcast %407 : vector<16x1xf32> to vector<16x256xf32>
    %409 = arith.addf %406, %408 : vector<16x256xf32>
    %c0_133 = arith.constant 0 : index
    %c0_134 = arith.constant 0 : index
    %410 = vector.load %arg6[%c0_133, %c0_134] : memref<16x256xf32, #tpu.memory_space<vmem>>, vector<16x256xf32>
    tpu.vector_store %arg6[%c0_133, %c0_134], %409 {strides = array<i32>} : memref<16x256xf32, #tpu.memory_space<vmem>>, vector<16x256xf32>,
    return
  }
}

</mosaic_0001>

<llo_original>
// kernel: tpu_custom_call.1
$region0: #{tpu_custom_call.1}
  #allocation0 [shape = 'u32[]', space=smem, size = 0x4, offset = 0x4, fixed_abs, tag = 'smem constant byte address 0x4 - core index']
  #allocation1 [shape = 'u32[144,128]{1,0:T(1,128)}', space=vmem, size = 0x12000, scoped, tag = 'internal scratch']
  %s0 = inlined_call_operand.hbm [shape: f32[16,256], index: 0, kind: input, shape index: {}]
  %s1 = inlined_call_operand.vmem [shape: f32[3,16,48], index: 1, kind: input, shape index: {}]
  %s2 = inlined_call_operand.vmem [shape: f32[3,16,16], index: 2, kind: input, shape index: {}]
  %s3 = inlined_call_operand.vmem [shape: f32[3,16,16], index: 3, kind: input, shape index: {}]
  %s4 = inlined_call_operand.vmem [shape: f32[9,8,1], index: 4, kind: input, shape index: {}]
  %s5 = inlined_call_operand.vmem [shape: f32[9,8,1], index: 5, kind: input, shape index: {}]
  %s6 = inlined_call_operand.hbm [shape: f32[16,256], index: 6, kind: output, shape index: {}]
  %s7 = sld [smem:[#allocation0]]
  $region38: #{tpu_custom_call.1} parent=0
    _
  %s9 = ssub.s32 1, %s7
  %s10 = scalar_select 0, %s9, %s7
  $region1: #{tpu_custom_call.1} parent=0
    #allocation2 [shape = 'u8[16384]{0}', space=vmem, size = 0x4000, scoped, tag = 'input window, operand 0, single buffered']
    #allocation3 [shape = 's32[1]{0}', space=sflag, size = 0x4, scoped, tag = 'scoped memory for tpu_custom_call.1']
    #allocation4 [shape = 's32[1]{0}', space=sflag, size = 0x4, scoped, tag = 'scoped memory for tpu_custom_call.1']
    #allocation5 [shape = 'u8[16384]{0}', space=vmem, size = 0x4000, scoped, tag = 'output window, operand 0, single buffered']
    %11 = vsyncpa [#allocation3], 0
    %12 = vsyncpa [#allocation4], 0
    // Predicated region
    $region2: #{tpu_custom_call.1} parent=1 // pred_check
      _
    $region3: #{tpu_custom_call.1} parent=1 // pred_check_branch
      %14 = sbr.rel (0) target = $region5
    $region4: #{tpu_custom_call.1} parent=1 // pred_region
      %s16 = ssub.s32 512, 512
      %17 = vsyncadd [#allocation3], %s16
      %s18 = sshll.u32 [#allocation2], 4
      %s19 = int_to_ptr.vmem [resolvable:$true] %s18
      %24 = dma.hbm_to_vmem [thread:$0]  %s0, 512, %s19, [#allocation3], 256, 256, 16
    $region5: #{tpu_custom_call.1} parent=1 // pred_fallthru
      _
    // Predicated region
    $region6: #{tpu_custom_call.1} parent=1 // pred_check
      _
    $region7: #{tpu_custom_call.1} parent=1 // pred_check_branch
      %26 = sbr.rel (0) target = $region9
    $region8: #{tpu_custom_call.1} parent=1 // pred_region
      _
    $region9: #{tpu_custom_call.1} parent=1 // pred_fallthru
      _
    // Predicated region
    $region10: #{tpu_custom_call.1} parent=1 // pred_check
      _
    $region11: #{tpu_custom_call.1} parent=1 // pred_check_branch
      %28 = sbr.rel (0) target = $region13
    $region12: #{tpu_custom_call.1} parent=1 // pred_region
      _
    $region13: #{tpu_custom_call.1} parent=1 // pred_fallthru
      _
    // Predicated region
    $region14: #{tpu_custom_call.1} parent=1 // pred_check
      _
    $region15: #{tpu_custom_call.1} parent=1 // pred_check_branch
      %30 = sbr.rel (0) target = $region17
    $region16: #{tpu_custom_call.1} parent=1 // pred_region
      _
    $region17: #{tpu_custom_call.1} parent=1 // pred_fallthru
      _
    // Predicated region
    $region18: #{tpu_custom_call.1} parent=1 // pred_check
      _
    $region19: #{tpu_custom_call.1} parent=1 // pred_check_branch
      %32 = sbr.rel (0) target = $region21
    $region20: #{tpu_custom_call.1} parent=1 // pred_region
      _
    $region21: #{tpu_custom_call.1} parent=1 // pred_fallthru
      _
    // Predicated region
    $region22: #{tpu_custom_call.1} parent=1 // pred_check
      _
    $region23: #{tpu_custom_call.1} parent=1 // pred_check_branch
      %34 = sbr.rel (0) target = $region25
    $region24: #{tpu_custom_call.1} parent=1 // pred_region
      _
    $region25: #{tpu_custom_call.1} parent=1 // pred_fallthru
      _
    // Predicated region
    $region26: #{tpu_custom_call.1} parent=1 // pred_check
      _
    $region27: #{tpu_custom_call.1} parent=1 // pred_check_branch
      %36 = sbr.rel (0) target = $region29
    $region28: #{tpu_custom_call.1} parent=1 // pred_region
      %37 = dma.done [#allocation3], 512
    $region29: #{tpu_custom_call.1} parent=1 // pred_fallthru
      _
    %v38 = vlaneseq
    %v39 = vand.u32 %v38, 127
    %v40 = vadd.s32 %v39, 128
    %vm41 = vcmp.lt.s32.totalorder %v39, 200
    %vm42 = vcmp.lt.s32.totalorder %v40, 200
    %v43 = vsel %vm41, 1, 0
    %v44 = vsel %vm42, 1, 0
    %v45 = vcvt.s32.f32 %v43
    %v46 = vcvt.s32.f32 %v44
    %v47 = vld [vmem:[#allocation2] sm:$0xff]
    %v48 = vld [vmem:[#allocation2 + $0x8] sm:$0xff]
    %v49 = vld [vmem:[#allocation2 + $0x10] sm:$0xff]
    %v50 = vld [vmem:[#allocation2 + $0x18] sm:$0xff]
    %v51 = vld [vmem:[%s3] sm:$0xff]
    %v52 = vld [vmem:[%s3 + $0x8] sm:$0xff]
    %vm53 = vcmask 130048
    %v55 = vsel %vm53, %v51, 0
    %v58 = vsel %vm53, %v52, 0
    %60 = vmatprep.subr.mxu0 0.0
    %61 = vmatpush1.msra.mxu0 0.0
    %62 = vmatprep.subr.mxu0 0.0
    %63 = vmatpush1.msra.mxu0 0.0
    %64 = vmatprep.subr.mxu0 0.0
    %65 = vmatpush1.msra.mxu0 0.0
    %66 = vmatprep.subr.mxu0 0.0
    %67 = vmatpush1.msra.mxu0 0.0
    %68 = vmatprep.subr.mxu0 0.0
    %69 = vmatpush1.msra.mxu0 0.0
    %70 = vmatprep.subr.mxu0 0.0
    %71 = vmatpush1.msra.mxu0 0.0
    %72 = vmatprep.subr.mxu0 0.0
    %73 = vmatpush1.msra.mxu0 0.0
    %74 = vmatprep.subr.mxu0 0.0
    %75 = vmatpush1.msra.mxu0 0.0
    %76 = vmatprep.subr.mxu0 0.0
    %77 = vmatpush1.msra.mxu0 0.0
    %78 = vmatprep.subr.mxu0 0.0
    %79 = vmatpush1.msra.mxu0 0.0
    %80 = vmatprep.subr.mxu0 0.0
    %81 = vmatpush1.msra.mxu0 0.0
    %82 = vmatprep.subr.mxu0 0.0
    %83 = vmatpush1.msra.mxu0 0.0
    %84 = vmatprep.subr.mxu0 0.0
    %85 = vmatpush1.msra.mxu0 0.0
    %86 = vmatprep.subr.mxu0 0.0
    %87 = vmatpush1.msra.mxu0 0.0
    %88 = vmatprep.subr.mxu0 %v50
    %89 = vmatpush1.msra.mxu0 %v49
    %90 = vmatprep.subr.mxu0 %v48
    %91 = vmatpush1.msra.mxu0 %v47
    %92 = vmatprep.subr.mxu0 0.0
    %93 = vmatpush2.msra.mxu0 0.0
    %94 = vmatprep.subr.mxu0 0.0
    %95 = vmatpush2.msra.mxu0 0.0
    %96 = vmatprep.subr.mxu0 0.0
    %97 = vmatpush2.msra.mxu0 0.0
    %98 = vmatprep.subr.mxu0 0.0
    %99 = vmatpush2.msra.mxu0 0.0
    %100 = vmatprep.subr.mxu0 0.0
    %101 = vmatpush2.msra.mxu0 0.0
    %102 = vmatprep.subr.mxu0 0.0
    %103 = vmatpush2.msra.mxu0 0.0
    %104 = vmatprep.subr.mxu0 0.0
    %105 = vmatpush2.msra.mxu0 0.0
    %106 = vmatprep.subr.mxu0 0.0
    %107 = vmatpush2.msra.mxu0 0.0
    %108 = vmatprep.subr.mxu0 0.0
    %109 = vmatpush2.msra.mxu0 0.0
    %110 = vmatprep.subr.mxu0 0.0
    %111 = vmatpush2.msra.mxu0 0.0
    %112 = vmatprep.subr.mxu0 0.0
    %113 = vmatpush2.msra.mxu0 0.0
    %114 = vmatprep.subr.mxu0 0.0
    %115 = vmatpush2.msra.mxu0 0.0
    %116 = vmatprep.subr.mxu0 0.0
    %117 = vmatpush2.msra.mxu0 0.0
    %118 = vmatprep.subr.mxu0 0.0
    %119 = vmatpush2.msra.mxu0 0.0
    %120 = vmatprep.subr.mxu0 0.0
    %121 = vmatpush2.msra.mxu0 0.0
    %122 = vmatprep.subr.mxu0 0.0
    %123 = vmatpush2.msra.mxu0 0.0
    %124 = vmatprep.mubr.f32.mxu0 0.0
    %125 = vmatmul.mubr.f32.gmra.mxu0 %v55
    %v126 = vpop.f32.mrf.mxu0
    %v127 = vadd.f32 0.0, %v126
    %v128 = vpop.f32.mrf.mxu0
    %v129 = vadd.f32 0.0, %v128
    %130 = vmatprep.mubr.f32.mxu0 0.0
    %131 = vmatmul.mubr.f32.gmra.mxu0 %v58
    %v132 = vpop.f32.mrf.mxu0
    %v133 = vadd.f32 0.0, %v132
    %v134 = vpop.f32.mrf.mxu0
    %v135 = vadd.f32 0.0, %v134
    %136 = vdwg.mxu0
    %v137 = vmul.f32 %v47, 0.2
    %v138 = vmul.f32 %v48, 0.2
    %v139 = vmul.f32 %v49, 0.2
    %v140 = vmul.f32 %v50, 0.2
    %v141 = vmax.f32 %v47, %v137
    %v142 = vmax.f32 %v48, %v138
    %v143 = vmax.f32 %v49, %v139
    %v144 = vmax.f32 %v50, %v140
    %147 = vrot.lane.b32.xlu0 %v141, 127
    %v148 = vpop.permute.xlu0 %147
    %149 = vrot.lane.b32.xlu0 %v143, 127
    %v150 = vpop.permute.xlu0 %149
    %155 = vrot.lane.b32.xlu0 %v141, 1
    %v156 = vpop.permute.xlu0 %155
    %157 = vrot.lane.b32.xlu0 %v142, 1
    %v158 = vpop.permute.xlu0 %157
    %159 = vrot.lane.b32.xlu0 %v143, 1
    %v160 = vpop.permute.xlu0 %159
    %161 = vrot.lane.b32.xlu0 %v144, 1
    %v162 = vpop.permute.xlu0 %161
    %vm163 = vcmask 7168
    %v164 = vsel %vm163, %v156, %v158
    %v165 = vsel %vm163, %v160, %v162
    %v170 = vsel %vm163, %v148, %v156
    %v171 = vsel %vm163, %v150, %v160
    %172 = vrot.lane.b32.xlu0 %v142, 127
    %v173 = vpop.permute.xlu0 %172
    %174 = vrot.lane.b32.xlu0 %v144, 127
    %v175 = vpop.permute.xlu0 %174
    %vm176 = vcmask 1039360
    %v177 = vsel %vm176, %v148, %v173
    %v178 = vsel %vm176, %v150, %v175
    %vm185 = vcmask 580608
    %v186 = vsel %vm185, %v173, %v158
    %v187 = vsel %vm185, %v175, %v162
    %vm188 = vcmask 588800
    %v189 = vsel %vm188, %v186, %v142
    %v190 = vsel %vm188, %v187, %v144
    %v191 = vld [vmem:[%s1] sm:$0xff]
    %v192 = vld [vmem:[%s1 + $0x8] sm:$0xff]
    %vm193 = vcmask 392192
    %v195 = vsel %vm193, %v191, 0
    %v198 = vsel %vm193, %v192, 0
    %200 = vmatprep.subr.mxu0 0.0
    %201 = vmatpush1.msra.mxu0 0.0
    %202 = vmatprep.subr.mxu0 0.0
    %203 = vmatpush1.msra.mxu0 0.0
    %204 = vmatprep.subr.mxu0 0.0
    %205 = vmatpush1.msra.mxu0 0.0
    %206 = vmatprep.subr.mxu0 0.0
    %207 = vmatpush1.msra.mxu0 0.0
    %208 = vmatprep.subr.mxu0 0.0
    %209 = vmatpush1.msra.mxu0 0.0
    %210 = vmatprep.subr.mxu0 0.0
    %211 = vmatpush1.msra.mxu0 0.0
    %212 = vmatprep.subr.mxu0 0.0
    %213 = vmatpush1.msra.mxu0 0.0
    %214 = vmatprep.subr.mxu0 0.0
    %215 = vmatpush1.msra.mxu0 0.0
    %216 = vmatprep.subr.mxu0 0.0
    %217 = vmatpush1.msra.mxu0 0.0
    %218 = vmatprep.subr.mxu0 0.0
    %219 = vmatpush1.msra.mxu0 0.0
    %220 = vmatprep.subr.mxu0 %v190
    %221 = vmatpush1.msra.mxu0 %v178
    %222 = vmatprep.subr.mxu0 %v189
    %223 = vmatpush1.msra.mxu0 %v177
    %224 = vmatprep.subr.mxu0 %v144
    %225 = vmatpush1.msra.mxu0 %v143
    %226 = vmatprep.subr.mxu0 %v142
    %227 = vmatpush1.msra.mxu0 %v141
    %228 = vmatprep.subr.mxu0 %v165
    %229 = vmatpush1.msra.mxu0 %v171
    %230 = vmatprep.subr.mxu0 %v164
    %231 = vmatpush1.msra.mxu0 %v170
    %232 = vmatprep.subr.mxu0 0.0
    %233 = vmatpush2.msra.mxu0 0.0
    %234 = vmatprep.subr.mxu0 0.0
    %235 = vmatpush2.msra.mxu0 0.0
    %236 = vmatprep.subr.mxu0 0.0
    %237 = vmatpush2.msra.mxu0 0.0
    %238 = vmatprep.subr.mxu0 0.0
    %239 = vmatpush2.msra.mxu0 0.0
    %240 = vmatprep.subr.mxu0 0.0
    %241 = vmatpush2.msra.mxu0 0.0
    %242 = vmatprep.subr.mxu0 0.0
    %243 = vmatpush2.msra.mxu0 0.0
    %244 = vmatprep.subr.mxu0 0.0
    %245 = vmatpush2.msra.mxu0 0.0
    %246 = vmatprep.subr.mxu0 0.0
    %247 = vmatpush2.msra.mxu0 0.0
    %248 = vmatprep.subr.mxu0 0.0
    %249 = vmatpush2.msra.mxu0 0.0
    %250 = vmatprep.subr.mxu0 0.0
    %251 = vmatpush2.msra.mxu0 0.0
    %252 = vmatprep.subr.mxu0 0.0
    %253 = vmatpush2.msra.mxu0 0.0
    %254 = vmatprep.subr.mxu0 0.0
    %255 = vmatpush2.msra.mxu0 0.0
    %256 = vmatprep.subr.mxu0 0.0
    %257 = vmatpush2.msra.mxu0 0.0
    %258 = vmatprep.subr.mxu0 0.0
    %259 = vmatpush2.msra.mxu0 0.0
    %260 = vmatprep.subr.mxu0 0.0
    %261 = vmatpush2.msra.mxu0 0.0
    %262 = vmatprep.subr.mxu0 0.0
    %263 = vmatpush2.msra.mxu0 0.0
    %264 = vmatprep.mubr.f32.mxu0 0.0
    %265 = vmatmul.mubr.f32.gmra.mxu0 %v195
    %v266 = vpop.f32.mrf.mxu0
    %v267 = vadd.f32 0.0, %v266
    %v268 = vpop.f32.mrf.mxu0
    %v269 = vadd.f32 0.0, %v268
    %270 = vmatprep.mubr.f32.mxu0 0.0
    %271 = vmatmul.mubr.f32.gmra.mxu0 %v198
    %v272 = vpop.f32.mrf.mxu0
    %v273 = vadd.f32 0.0, %v272
    %v274 = vpop.f32.mrf.mxu0
    %v275 = vadd.f32 0.0, %v274
    %276 = vdwg.mxu0
    %v277 = vmul.f32 %v267, %v45
    %v278 = vmul.f32 %v269, %v46
    %v279 = vmul.f32 %v273, %v45
    %v280 = vmul.f32 %v275, %v46
    %v281 = vadd.f32 %v277, %v278
    %282 = vadd.xlane.f32.xlu0 %v281
    %v283 = vpop.xlane.xlu0 %282
    %v284 = vadd.f32 %v279, %v280
    %285 = vadd.xlane.f32.xlu0 %v284
    %v286 = vpop.xlane.xlu0 %285
    %v287 = vadd.f32 %v283, %v286
    %v288 = vmul.f32 %v277, %v277
    %v289 = vmul.f32 %v278, %v278
    %v290 = vmul.f32 %v279, %v279
    %v291 = vmul.f32 %v280, %v280
    %v292 = vadd.f32 %v288, %v289
    %293 = vadd.xlane.f32.xlu0 %v292
    %v294 = vpop.xlane.xlu0 %293
    %v295 = vadd.f32 %v290, %v291
    %296 = vadd.xlane.f32.xlu0 %v295
    %v297 = vpop.xlane.xlu0 %296
    %v298 = vadd.f32 %v294, %v297
    %v299 = vmul.f32 %v287, 0.0025
    %v300 = vmul.f32 %v298, 0.0025
    %v301 = vmul.f32 %v299, %v299
    %v302 = vsub.f32 %v300, %v301
    %v303 = vld [vmem:[%s4] sm:$0xff]
    %v304 = vadd.f32 %v302, 1e-05
    %v305 = vrsqrt.pop %v304
    %v306 = vmul.f32 %v303, %v305
    %v307 = vld [vmem:[%s5] sm:$0xff]
    %v308 = vmul.f32 %v299, %v306
    %v309 = vsub.f32 %v307, %v308
    %311 = vset.pattern.permute.xlu0 0
    %312 = vperm.xlu0 %311, %v306
    %v313 = vpop.permute.xlu0 %312
    %v315 = vmul.f32 %v267, %v313
    %v316 = vmul.f32 %v269, %v313
    %v317 = vmul.f32 %v273, %v313
    %v318 = vmul.f32 %v275, %v313
    %320 = vset.pattern.permute.xlu0 0
    %321 = vperm.xlu0 %320, %v309
    %v322 = vpop.permute.xlu0 %321
    %v324 = vadd.f32 %v315, %v322
    %v325 = vadd.f32 %v316, %v322
    %v326 = vadd.f32 %v317, %v322
    %v327 = vadd.f32 %v318, %v322
    %v328 = vmul.f32 %v324, 0.2
    %v329 = vmul.f32 %v325, 0.2
    %v330 = vmul.f32 %v326, 0.2
    %v331 = vmul.f32 %v327, 0.2
    %v332 = vmax.f32 %v324, %v328
    %v333 = vmax.f32 %v325, %v329
    %v334 = vmax.f32 %v326, %v330
    %v335 = vmax.f32 %v327, %v331
    %v336 = vld [vmem:[%s2] sm:$0xff]
    %v337 = vld [vmem:[%s2 + $0x8] sm:$0xff]
    %v339 = vsel %vm53, %v336, 0
    %v342 = vsel %vm53, %v337, 0
    %344 = vmatprep.subr.mxu0 0.0
    %345 = vmatpush1.msra.mxu0 0.0
    %346 = vmatprep.subr.mxu0 0.0
    %347 = vmatpush1.msra.mxu0 0.0
    %348 = vmatprep.subr.mxu0 0.0
    %349 = vmatpush1.msra.mxu0 0.0
    %350 = vmatprep.subr.mxu0 0.0
    %351 = vmatpush1.msra.mxu0 0.0
    %352 = vmatprep.subr.mxu0 0.0
    %353 = vmatpush1.msra.mxu0 0.0
    %354 = vmatprep.subr.mxu0 0.0
    %355 = vmatpush1.msra.mxu0 0.0
    %356 = vmatprep.subr.mxu0 0.0
    %357 = vmatpush1.msra.mxu0 0.0
    %358 = vmatprep.subr.mxu0 0.0
    %359 = vmatpush1.msra.mxu0 0.0
    %360 = vmatprep.subr.mxu0 0.0
    %361 = vmatpush1.msra.mxu0 0.0
    %362 = vmatprep.subr.mxu0 0.0
    %363 = vmatpush1.msra.mxu0 0.0
    %364 = vmatprep.subr.mxu0 0.0
    %365 = vmatpush1.msra.mxu0 0.0
    %366 = vmatprep.subr.mxu0 0.0
    %367 = vmatpush1.msra.mxu0 0.0
    %368 = vmatprep.subr.mxu0 0.0
    %369 = vmatpush1.msra.mxu0 0.0
    %370 = vmatprep.subr.mxu0 0.0
    %371 = vmatpush1.msra.mxu0 0.0
    %372 = vmatprep.subr.mxu0 %v335
    %373 = vmatpush1.msra.mxu0 %v334
    %374 = vmatprep.subr.mxu0 %v333
    %375 = vmatpush1.msra.mxu0 %v332
    %376 = vmatprep.subr.mxu0 0.0
    %377 = vmatpush2.msra.mxu0 0.0
    %378 = vmatprep.subr.mxu0 0.0
    %379 = vmatpush2.msra.mxu0 0.0
    %380 = vmatprep.subr.mxu0 0.0
    %381 = vmatpush2.msra.mxu0 0.0
    %382 = vmatprep.subr.mxu0 0.0
    %383 = vmatpush2.msra.mxu0 0.0
    %384 = vmatprep.subr.mxu0 0.0
    %385 = vmatpush2.msra.mxu0 0.0
    %386 = vmatprep.subr.mxu0 0.0
    %387 = vmatpush2.msra.mxu0 0.0
    %388 = vmatprep.subr.mxu0 0.0
    %389 = vmatpush2.msra.mxu0 0.0
    %390 = vmatprep.subr.mxu0 0.0
    %391 = vmatpush2.msra.mxu0 0.0
    %392 = vmatprep.subr.mxu0 0.0
    %393 = vmatpush2.msra.mxu0 0.0
    %394 = vmatprep.subr.mxu0 0.0
    %395 = vmatpush2.msra.mxu0 0.0
    %396 = vmatprep.subr.mxu0 0.0
    %397 = vmatpush2.msra.mxu0 0.0
    %398 = vmatprep.subr.mxu0 0.0
    %399 = vmatpush2.msra.mxu0 0.0
    %400 = vmatprep.subr.mxu0 0.0
    %401 = vmatpush2.msra.mxu0 0.0
    %402 = vmatprep.subr.mxu0 0.0
    %403 = vmatpush2.msra.mxu0 0.0
    %404 = vmatprep.subr.mxu0 0.0
    %405 = vmatpush2.msra.mxu0 0.0
    %406 = vmatprep.subr.mxu0 0.0
    %407 = vmatpush2.msra.mxu0 0.0
    %408 = vmatprep.mubr.f32.mxu0 0.0
    %409 = vmatmul.mubr.f32.gmra.mxu0 %v339
    %v410 = vpop.f32.mrf.mxu0
    %v411 = vadd.f32 0.0, %v410
    %v412 = vpop.f32.mrf.mxu0
    %v413 = vadd.f32 0.0, %v412
    %414 = vmatprep.mubr.f32.mxu0 0.0
    %415 = vmatmul.mubr.f32.gmra.mxu0 %v342
    %v416 = vpop.f32.mrf.mxu0
    %v417 = vadd.f32 0.0, %v416
    %v418 = vpop.f32.mrf.mxu0
    %v419 = vadd.f32 0.0, %v418
    %420 = vdwg.mxu0
    %v421 = vmul.f32 %v411, %v45
    %v422 = vmul.f32 %v413, %v46
    %v423 = vmul.f32 %v417, %v45
    %v424 = vmul.f32 %v419, %v46
    %v425 = vadd.f32 %v421, %v422
    %426 = vadd.xlane.f32.xlu0 %v425
    %v427 = vpop.xlane.xlu0 %426
    %v428 = vadd.f32 %v423, %v424
    %429 = vadd.xlane.f32.xlu0 %v428
    %v430 = vpop.xlane.xlu0 %429
    %v431 = vadd.f32 %v427, %v430
    %v432 = vmul.f32 %v421, %v421
    %v433 = vmul.f32 %v422, %v422
    %v434 = vmul.f32 %v423, %v423
    %v435 = vmul.f32 %v424, %v424
    %v436 = vadd.f32 %v432, %v433
    %437 = vadd.xlane.f32.xlu0 %v436
    %v438 = vpop.xlane.xlu0 %437
    %v439 = vadd.f32 %v434, %v435
    %440 = vadd.xlane.f32.xlu0 %v439
    %v441 = vpop.xlane.xlu0 %440
    %v442 = vadd.f32 %v438, %v441
    %v443 = vmul.f32 %v431, 0.0025
    %v444 = vmul.f32 %v442, 0.0025
    %v445 = vmul.f32 %v443, %v443
    %v446 = vsub.f32 %v444, %v445
    %s447 = scalar_lea.vmem %s4, 8
    %v448 = vld [vmem:[%s447] sm:$0xff]
    %v449 = vadd.f32 %v446, 1e-05
    %v450 = vrsqrt.pop %v449
    %v451 = vmul.f32 %v448, %v450
    %s452 = scalar_lea.vmem %s5, 8
    %v453 = vld [vmem:[%s452] sm:$0xff]
    %v454 = vmul.f32 %v443, %v451
    %v455 = vsub.f32 %v453, %v454
    %v456 = vmul.f32 %v127, %v45
    %v457 = vmul.f32 %v129, %v46
    %v458 = vmul.f32 %v133, %v45
    %v459 = vmul.f32 %v135, %v46
    %v460 = vadd.f32 %v456, %v457
    %461 = vadd.xlane.f32.xlu0 %v460
    %v462 = vpop.xlane.xlu0 %461
    %v463 = vadd.f32 %v458, %v459
    %464 = vadd.xlane.f32.xlu0 %v463
    %v465 = vpop.xlane.xlu0 %464
    %v466 = vadd.f32 %v462, %v465
    %v467 = vmul.f32 %v456, %v456
    %v468 = vmul.f32 %v457, %v457
    %v469 = vmul.f32 %v458, %v458
    %v470 = vmul.f32 %v459, %v459
    %v471 = vadd.f32 %v467, %v468
    %472 = vadd.xlane.f32.xlu0 %v471
    %v473 = vpop.xlane.xlu0 %472
    %v474 = vadd.f32 %v469, %v470
    %475 = vadd.xlane.f32.xlu0 %v474
    %v476 = vpop.xlane.xlu0 %475
    %v477 = vadd.f32 %v473, %v476
    %v478 = vmul.f32 %v466, 0.0025
    %v479 = vmul.f32 %v477, 0.0025
    %v480 = vmul.f32 %v478, %v478
    %v481 = vsub.f32 %v479, %v480
    %s482 = scalar_lea.vmem %s4, 16
    %v483 = vld [vmem:[%s482] sm:$0xff]
    %v484 = vadd.f32 %v481, 1e-05
    %v485 = vrsqrt.pop %v484
    %v486 = vmul.f32 %v483, %v485
    %s487 = scalar_lea.vmem %s5, 16
    %v488 = vld [vmem:[%s487] sm:$0xff]
    %v489 = vmul.f32 %v478, %v486
    %v490 = vsub.f32 %v488, %v489
    %492 = vset.pattern.permute.xlu0 0
    %493 = vperm.xlu0 %492, %v451
    %v494 = vpop.permute.xlu0 %493
    %v496 = vmul.f32 %v411, %v494
    %v497 = vmul.f32 %v413, %v494
    %v498 = vmul.f32 %v417, %v494
    %v499 = vmul.f32 %v419, %v494
    %501 = vset.pattern.permute.xlu0 0
    %502 = vperm.xlu0 %501, %v486
    %v503 = vpop.permute.xlu0 %502
    %v505 = vmul.f32 %v127, %v503
    %v506 = vmul.f32 %v129, %v503
    %v507 = vmul.f32 %v133, %v503
    %v508 = vmul.f32 %v135, %v503
    %v509 = vadd.f32 %v496, %v505
    %v510 = vadd.f32 %v497, %v506
    %v511 = vadd.f32 %v498, %v507
    %v512 = vadd.f32 %v499, %v508
    %v513 = vadd.f32 %v455, %v490
    %515 = vset.pattern.permute.xlu0 0
    %516 = vperm.xlu0 %515, %v513
    %v517 = vpop.permute.xlu0 %516
    %v519 = vadd.f32 %v509, %v517
    %v520 = vadd.f32 %v510, %v517
    %v521 = vadd.f32 %v511, %v517
    %v522 = vadd.f32 %v512, %v517
    %s523 = scalar_lea.vmem %s3, 16
    %v524 = vld [vmem:[%s523] sm:$0xff]
    %v525 = vld [vmem:[%s523 + $0x8] sm:$0xff]
    %v527 = vsel %vm53, %v524, 0
    %v530 = vsel %vm53, %v525, 0
    %532 = vmatprep.subr.mxu0 0.0
    %533 = vmatpush1.msra.mxu0 0.0
    %534 = vmatprep.subr.mxu0 0.0
    %535 = vmatpush1.msra.mxu0 0.0
    %536 = vmatprep.subr.mxu0 0.0
    %537 = vmatpush1.msra.mxu0 0.0
    %538 = vmatprep.subr.mxu0 0.0
    %539 = vmatpush1.msra.mxu0 0.0
    %540 = vmatprep.subr.mxu0 0.0
    %541 = vmatpush1.msra.mxu0 0.0
    %542 = vmatprep.subr.mxu0 0.0
    %543 = vmatpush1.msra.mxu0 0.0
    %544 = vmatprep.subr.mxu0 0.0
    %545 = vmatpush1.msra.mxu0 0.0
    %546 = vmatprep.subr.mxu0 0.0
    %547 = vmatpush1.msra.mxu0 0.0
    %548 = vmatprep.subr.mxu0 0.0
    %549 = vmatpush1.msra.mxu0 0.0
    %550 = vmatprep.subr.mxu0 0.0
    %551 = vmatpush1.msra.mxu0 0.0
    %552 = vmatprep.subr.mxu0 0.0
    %553 = vmatpush1.msra.mxu0 0.0
    %554 = vmatprep.subr.mxu0 0.0
    %555 = vmatpush1.msra.mxu0 0.0
    %556 = vmatprep.subr.mxu0 0.0
    %557 = vmatpush1.msra.mxu0 0.0
    %558 = vmatprep.subr.mxu0 0.0
    %559 = vmatpush1.msra.mxu0 0.0
    %560 = vmatprep.subr.mxu0 %v522
    %561 = vmatpush1.msra.mxu0 %v521
    %562 = vmatprep.subr.mxu0 %v520
    %563 = vmatpush1.msra.mxu0 %v519
    %564 = vmatprep.subr.mxu0 0.0
    %565 = vmatpush2.msra.mxu0 0.0
    %566 = vmatprep.subr.mxu0 0.0
    %567 = vmatpush2.msra.mxu0 0.0
    %568 = vmatprep.subr.mxu0 0.0
    %569 = vmatpush2.msra.mxu0 0.0
    %570 = vmatprep.subr.mxu0 0.0
    %571 = vmatpush2.msra.mxu0 0.0
    %572 = vmatprep.subr.mxu0 0.0
    %573 = vmatpush2.msra.mxu0 0.0
    %574 = vmatprep.subr.mxu0 0.0
    %575 = vmatpush2.msra.mxu0 0.0
    %576 = vmatprep.subr.mxu0 0.0
    %577 = vmatpush2.msra.mxu0 0.0
    %578 = vmatprep.subr.mxu0 0.0
    %579 = vmatpush2.msra.mxu0 0.0
    %580 = vmatprep.subr.mxu0 0.0
    %581 = vmatpush2.msra.mxu0 0.0
    %582 = vmatprep.subr.mxu0 0.0
    %583 = vmatpush2.msra.mxu0 0.0
    %584 = vmatprep.subr.mxu0 0.0
    %585 = vmatpush2.msra.mxu0 0.0
    %586 = vmatprep.subr.mxu0 0.0
    %587 = vmatpush2.msra.mxu0 0.0
    %588 = vmatprep.subr.mxu0 0.0
    %589 = vmatpush2.msra.mxu0 0.0
    %590 = vmatprep.subr.mxu0 0.0
    %591 = vmatpush2.msra.mxu0 0.0
    %592 = vmatprep.subr.mxu0 0.0
    %593 = vmatpush2.msra.mxu0 0.0
    %594 = vmatprep.subr.mxu0 0.0
    %595 = vmatpush2.msra.mxu0 0.0
    %596 = vmatprep.mubr.f32.mxu0 0.0
    %597 = vmatmul.mubr.f32.gmra.mxu0 %v527
    %v598 = vpop.f32.mrf.mxu0
    %v599 = vadd.f32 0.0, %v598
    %v600 = vpop.f32.mrf.mxu0
    %v601 = vadd.f32 0.0, %v600
    %602 = vmatprep.mubr.f32.mxu0 0.0
    %603 = vmatmul.mubr.f32.gmra.mxu0 %v530
    %v604 = vpop.f32.mrf.mxu0
    %v605 = vadd.f32 0.0, %v604
    %v606 = vpop.f32.mrf.mxu0
    %v607 = vadd.f32 0.0, %v606
    %608 = vdwg.mxu0
    %v609 = vmul.f32 %v519, 0.2
    %v610 = vmul.f32 %v520, 0.2
    %v611 = vmul.f32 %v521, 0.2
    %v612 = vmul.f32 %v522, 0.2
    %v613 = vmax.f32 %v519, %v609
    %v614 = vmax.f32 %v520, %v610
    %v615 = vmax.f32 %v521, %v611
    %v616 = vmax.f32 %v522, %v612
    %619 = vrot.lane.b32.xlu0 %v613, 125
    %v620 = vpop.permute.xlu0 %619
    %621 = vrot.lane.b32.xlu0 %v615, 125
    %v622 = vpop.permute.xlu0 %621
    %625 = vrot.lane.b32.xlu0 %v613, 127
    %v626 = vpop.permute.xlu0 %625
    %627 = vrot.lane.b32.xlu0 %v615, 127
    %v628 = vpop.permute.xlu0 %627
    %631 = vrot.lane.b32.xlu0 %v613, 1
    %v632 = vpop.permute.xlu0 %631
    %633 = vrot.lane.b32.xlu0 %v615, 1
    %v634 = vpop.permute.xlu0 %633
    %639 = vrot.lane.b32.xlu0 %v613, 3
    %v640 = vpop.permute.xlu0 %639
    %641 = vrot.lane.b32.xlu0 %v614, 3
    %v642 = vpop.permute.xlu0 %641
    %643 = vrot.lane.b32.xlu0 %v615, 3
    %v644 = vpop.permute.xlu0 %643
    %645 = vrot.lane.b32.xlu0 %v616, 3
    %v646 = vpop.permute.xlu0 %645
    %vm647 = vcmask 23552
    %v648 = vsel %vm647, %v640, %v642
    %v649 = vsel %vm647, %v644, %v646
    %v654 = vsel %vm163, %v620, %v626
    %v655 = vsel %vm163, %v622, %v628
    %vm656 = vcmask 15360
    %v657 = vsel %vm656, %v654, %v632
    %v658 = vsel %vm656, %v655, %v634
    %v659 = vsel %vm647, %v657, %v640
    %v660 = vsel %vm647, %v658, %v644
    %661 = vrot.lane.b32.xlu0 %v614, 125
    %v662 = vpop.permute.xlu0 %661
    %663 = vrot.lane.b32.xlu0 %v616, 125
    %v664 = vpop.permute.xlu0 %663
    %vm665 = vcmask 1022976
    %v666 = vsel %vm665, %v620, %v662
    %v667 = vsel %vm665, %v622, %v664
    %672 = vrot.lane.b32.xlu0 %v614, 127
    %v673 = vpop.permute.xlu0 %672
    %674 = vrot.lane.b32.xlu0 %v616, 127
    %v675 = vpop.permute.xlu0 %674
    %678 = vrot.lane.b32.xlu0 %v614, 1
    %v679 = vpop.permute.xlu0 %678
    %680 = vrot.lane.b32.xlu0 %v616, 1
    %v681 = vpop.permute.xlu0 %680
    %vm686 = vcmask 564224
    %v687 = vsel %vm686, %v662, %v673
    %v688 = vsel %vm686, %v664, %v675
    %vm689 = vcmask 572416
    %v690 = vsel %vm689, %v687, %v679
    %v691 = vsel %vm689, %v688, %v681
    %v692 = vsel %vm185, %v690, %v642
    %v693 = vsel %vm185, %v691, %v646
    %v694 = vsel %vm188, %v692, %v614
    %v695 = vsel %vm188, %v693, %v616
    %s696 = scalar_lea.vmem %s1, 16
    %v697 = vld [vmem:[%s696] sm:$0xff]
    %v698 = vld [vmem:[%s696 + $0x8] sm:$0xff]
    %v700 = vsel %vm193, %v697, 0
    %v703 = vsel %vm193, %v698, 0
    %705 = vmatprep.subr.mxu0 0.0
    %706 = vmatpush1.msra.mxu0 0.0
    %707 = vmatprep.subr.mxu0 0.0
    %708 = vmatpush1.msra.mxu0 0.0
    %709 = vmatprep.subr.mxu0 0.0
    %710 = vmatpush1.msra.mxu0 0.0
    %711 = vmatprep.subr.mxu0 0.0
    %712 = vmatpush1.msra.mxu0 0.0
    %713 = vmatprep.subr.mxu0 0.0
    %714 = vmatpush1.msra.mxu0 0.0
    %715 = vmatprep.subr.mxu0 0.0
    %716 = vmatpush1.msra.mxu0 0.0
    %717 = vmatprep.subr.mxu0 0.0
    %718 = vmatpush1.msra.mxu0 0.0
    %719 = vmatprep.subr.mxu0 0.0
    %720 = vmatpush1.msra.mxu0 0.0
    %721 = vmatprep.subr.mxu0 0.0
    %722 = vmatpush1.msra.mxu0 0.0
    %723 = vmatprep.subr.mxu0 0.0
    %724 = vmatpush1.msra.mxu0 0.0
    %725 = vmatprep.subr.mxu0 %v695
    %726 = vmatpush1.msra.mxu0 %v667
    %727 = vmatprep.subr.mxu0 %v694
    %728 = vmatpush1.msra.mxu0 %v666
    %729 = vmatprep.subr.mxu0 %v616
    %730 = vmatpush1.msra.mxu0 %v615
    %731 = vmatprep.subr.mxu0 %v614
    %732 = vmatpush1.msra.mxu0 %v613
    %733 = vmatprep.subr.mxu0 %v649
    %734 = vmatpush1.msra.mxu0 %v660
    %735 = vmatprep.subr.mxu0 %v648
    %736 = vmatpush1.msra.mxu0 %v659
    %737 = vmatprep.subr.mxu0 0.0
    %738 = vmatpush2.msra.mxu0 0.0
    %739 = vmatprep.subr.mxu0 0.0
    %740 = vmatpush2.msra.mxu0 0.0
    %741 = vmatprep.subr.mxu0 0.0
    %742 = vmatpush2.msra.mxu0 0.0
    %743 = vmatprep.subr.mxu0 0.0
    %744 = vmatpush2.msra.mxu0 0.0
    %745 = vmatprep.subr.mxu0 0.0
    %746 = vmatpush2.msra.mxu0 0.0
    %747 = vmatprep.subr.mxu0 0.0
    %748 = vmatpush2.msra.mxu0 0.0
    %749 = vmatprep.subr.mxu0 0.0
    %750 = vmatpush2.msra.mxu0 0.0
    %751 = vmatprep.subr.mxu0 0.0
    %752 = vmatpush2.msra.mxu0 0.0
    %753 = vmatprep.subr.mxu0 0.0
    %754 = vmatpush2.msra.mxu0 0.0
    %755 = vmatprep.subr.mxu0 0.0
    %756 = vmatpush2.msra.mxu0 0.0
    %757 = vmatprep.subr.mxu0 0.0
    %758 = vmatpush2.msra.mxu0 0.0
    %759 = vmatprep.subr.mxu0 0.0
    %760 = vmatpush2.msra.mxu0 0.0
    %761 = vmatprep.subr.mxu0 0.0
    %762 = vmatpush2.msra.mxu0 0.0
    %763 = vmatprep.subr.mxu0 0.0
    %764 = vmatpush2.msra.mxu0 0.0
    %765 = vmatprep.subr.mxu0 0.0
    %766 = vmatpush2.msra.mxu0 0.0
    %767 = vmatprep.subr.mxu0 0.0
    %768 = vmatpush2.msra.mxu0 0.0
    %769 = vmatprep.mubr.f32.mxu0 0.0
    %770 = vmatmul.mubr.f32.gmra.mxu0 %v700
    %v771 = vpop.f32.mrf.mxu0
    %v772 = vadd.f32 0.0, %v771
    %v773 = vpop.f32.mrf.mxu0
    %v774 = vadd.f32 0.0, %v773
    %775 = vmatprep.mubr.f32.mxu0 0.0
    %776 = vmatmul.mubr.f32.gmra.mxu0 %v703
    %v777 = vpop.f32.mrf.mxu0
    %v778 = vadd.f32 0.0, %v777
    %v779 = vpop.f32.mrf.mxu0
    %v780 = vadd.f32 0.0, %v779
    %781 = vdwg.mxu0
    %v782 = vmul.f32 %v772, %v45
    %v783 = vmul.f32 %v774, %v46
    %v784 = vmul.f32 %v778, %v45
    %v785 = vmul.f32 %v780, %v46
    %v786 = vadd.f32 %v782, %v783
    %787 = vadd.xlane.f32.xlu0 %v786
    %v788 = vpop.xlane.xlu0 %787
    %v789 = vadd.f32 %v784, %v785
    %790 = vadd.xlane.f32.xlu0 %v789
    %v791 = vpop.xlane.xlu0 %790
    %v792 = vadd.f32 %v788, %v791
    %v793 = vmul.f32 %v782, %v782
    %v794 = vmul.f32 %v783, %v783
    %v795 = vmul.f32 %v784, %v784
    %v796 = vmul.f32 %v785, %v785
    %v797 = vadd.f32 %v793, %v794
    %798 = vadd.xlane.f32.xlu0 %v797
    %v799 = vpop.xlane.xlu0 %798
    %v800 = vadd.f32 %v795, %v796
    %801 = vadd.xlane.f32.xlu0 %v800
    %v802 = vpop.xlane.xlu0 %801
    %v803 = vadd.f32 %v799, %v802
    %v804 = vmul.f32 %v792, 0.0025
    %v805 = vmul.f32 %v803, 0.0025
    %v806 = vmul.f32 %v804, %v804
    %v807 = vsub.f32 %v805, %v806
    %s808 = scalar_lea.vmem %s4, 24
    %v809 = vld [vmem:[%s808] sm:$0xff]
    %v810 = vadd.f32 %v807, 1e-05
    %v811 = vrsqrt.pop %v810
    %v812 = vmul.f32 %v809, %v811
    %s813 = scalar_lea.vmem %s5, 24
    %v814 = vld [vmem:[%s813] sm:$0xff]
    %v815 = vmul.f32 %v804, %v812
    %v816 = vsub.f32 %v814, %v815
    %818 = vset.pattern.permute.xlu0 0
    %819 = vperm.xlu0 %818, %v812
    %v820 = vpop.permute.xlu0 %819
    %v822 = vmul.f32 %v772, %v820
    %v823 = vmul.f32 %v774, %v820
    %v824 = vmul.f32 %v778, %v820
    %v825 = vmul.f32 %v780, %v820
    %827 = vset.pattern.permute.xlu0 0
    %828 = vperm.xlu0 %827, %v816
    %v829 = vpop.permute.xlu0 %828
    %v831 = vadd.f32 %v822, %v829
    %v832 = vadd.f32 %v823, %v829
    %v833 = vadd.f32 %v824, %v829
    %v834 = vadd.f32 %v825, %v829
    %v835 = vmul.f32 %v831, 0.2
    %v836 = vmul.f32 %v832, 0.2
    %v837 = vmul.f32 %v833, 0.2
    %v838 = vmul.f32 %v834, 0.2
    %v839 = vmax.f32 %v831, %v835
    %v840 = vmax.f32 %v832, %v836
    %v841 = vmax.f32 %v833, %v837
    %v842 = vmax.f32 %v834, %v838
    %s843 = scalar_lea.vmem %s2, 16
    %v844 = vld [vmem:[%s843] sm:$0xff]
    %v845 = vld [vmem:[%s843 + $0x8] sm:$0xff]
    %v847 = vsel %vm53, %v844, 0
    %v850 = vsel %vm53, %v845, 0
    %852 = vmatprep.subr.mxu0 0.0
    %853 = vmatpush1.msra.mxu0 0.0
    %854 = vmatprep.subr.mxu0 0.0
    %855 = vmatpush1.msra.mxu0 0.0
    %856 = vmatprep.subr.mxu0 0.0
    %857 = vmatpush1.msra.mxu0 0.0
    %858 = vmatprep.subr.mxu0 0.0
    %859 = vmatpush1.msra.mxu0 0.0
    %860 = vmatprep.subr.mxu0 0.0
    %861 = vmatpush1.msra.mxu0 0.0
    %862 = vmatprep.subr.mxu0 0.0
    %863 = vmatpush1.msra.mxu0 0.0
    %864 = vmatprep.subr.mxu0 0.0
    %865 = vmatpush1.msra.mxu0 0.0
    %866 = vmatprep.subr.mxu0 0.0
    %867 = vmatpush1.msra.mxu0 0.0
    %868 = vmatprep.subr.mxu0 0.0
    %869 = vmatpush1.msra.mxu0 0.0
    %870 = vmatprep.subr.mxu0 0.0
    %871 = vmatpush1.msra.mxu0 0.0
    %872 = vmatprep.subr.mxu0 0.0
    %873 = vmatpush1.msra.mxu0 0.0
    %874 = vmatprep.subr.mxu0 0.0
    %875 = vmatpush1.msra.mxu0 0.0
    %876 = vmatprep.subr.mxu0 0.0
    %877 = vmatpush1.msra.mxu0 0.0
    %878 = vmatprep.subr.mxu0 0.0
    %879 = vmatpush1.msra.mxu0 0.0
    %880 = vmatprep.subr.mxu0 %v842
    %881 = vmatpush1.msra.mxu0 %v841
    %882 = vmatprep.subr.mxu0 %v840
    %883 = vmatpush1.msra.mxu0 %v839
    %884 = vmatprep.subr.mxu0 0.0
    %885 = vmatpush2.msra.mxu0 0.0
    %886 = vmatprep.subr.mxu0 0.0
    %887 = vmatpush2.msra.mxu0 0.0
    %888 = vmatprep.subr.mxu0 0.0
    %889 = vmatpush2.msra.mxu0 0.0
    %890 = vmatprep.subr.mxu0 0.0
    %891 = vmatpush2.msra.mxu0 0.0
    %892 = vmatprep.subr.mxu0 0.0
    %893 = vmatpush2.msra.mxu0 0.0
    %894 = vmatprep.subr.mxu0 0.0
    %895 = vmatpush2.msra.mxu0 0.0
    %896 = vmatprep.subr.mxu0 0.0
    %897 = vmatpush2.msra.mxu0 0.0
    %898 = vmatprep.subr.mxu0 0.0
    %899 = vmatpush2.msra.mxu0 0.0
    %900 = vmatprep.subr.mxu0 0.0
    %901 = vmatpush2.msra.mxu0 0.0
    %902 = vmatprep.subr.mxu0 0.0
    %903 = vmatpush2.msra.mxu0 0.0
    %904 = vmatprep.subr.mxu0 0.0
    %905 = vmatpush2.msra.mxu0 0.0
    %906 = vmatprep.subr.mxu0 0.0
    %907 = vmatpush2.msra.mxu0 0.0
    %908 = vmatprep.subr.mxu0 0.0
    %909 = vmatpush2.msra.mxu0 0.0
    %910 = vmatprep.subr.mxu0 0.0
    %911 = vmatpush2.msra.mxu0 0.0
    %912 = vmatprep.subr.mxu0 0.0
    %913 = vmatpush2.msra.mxu0 0.0
    %914 = vmatprep.subr.mxu0 0.0
    %915 = vmatpush2.msra.mxu0 0.0
    %916 = vmatprep.mubr.f32.mxu0 0.0
    %917 = vmatmul.mubr.f32.gmra.mxu0 %v847
    %v918 = vpop.f32.mrf.mxu0
    %v919 = vadd.f32 0.0, %v918
    %v920 = vpop.f32.mrf.mxu0
    %v921 = vadd.f32 0.0, %v920
    %922 = vmatprep.mubr.f32.mxu0 0.0
    %923 = vmatmul.mubr.f32.gmra.mxu0 %v850
    %v924 = vpop.f32.mrf.mxu0
    %v925 = vadd.f32 0.0, %v924
    %v926 = vpop.f32.mrf.mxu0
    %v927 = vadd.f32 0.0, %v926
    %928 = vdwg.mxu0
    %v929 = vmul.f32 %v919, %v45
    %v930 = vmul.f32 %v921, %v46
    %v931 = vmul.f32 %v925, %v45
    %v932 = vmul.f32 %v927, %v46
    %v933 = vadd.f32 %v929, %v930
    %934 = vadd.xlane.f32.xlu0 %v933
    %v935 = vpop.xlane.xlu0 %934
    %v936 = vadd.f32 %v931, %v932
    %937 = vadd.xlane.f32.xlu0 %v936
    %v938 = vpop.xlane.xlu0 %937
    %v939 = vadd.f32 %v935, %v938
    %v940 = vmul.f32 %v929, %v929
    %v941 = vmul.f32 %v930, %v930
    %v942 = vmul.f32 %v931, %v931
    %v943 = vmul.f32 %v932, %v932
    %v944 = vadd.f32 %v940, %v941
    %945 = vadd.xlane.f32.xlu0 %v944
    %v946 = vpop.xlane.xlu0 %945
    %v947 = vadd.f32 %v942, %v943
    %948 = vadd.xlane.f32.xlu0 %v947
    %v949 = vpop.xlane.xlu0 %948
    %v950 = vadd.f32 %v946, %v949
    %v951 = vmul.f32 %v939, 0.0025
    %v952 = vmul.f32 %v950, 0.0025
    %v953 = vmul.f32 %v951, %v951
    %v954 = vsub.f32 %v952, %v953
    %s955 = scalar_lea.vmem %s4, 32
    %v956 = vld [vmem:[%s955] sm:$0xff]
    %v957 = vadd.f32 %v954, 1e-05
    %v958 = vrsqrt.pop %v957
    %v959 = vmul.f32 %v956, %v958
    %s960 = scalar_lea.vmem %s5, 32
    %v961 = vld [vmem:[%s960] sm:$0xff]
    %v962 = vmul.f32 %v951, %v959
    %v963 = vsub.f32 %v961, %v962
    %v964 = vmul.f32 %v599, %v45
    %v965 = vmul.f32 %v601, %v46
    %v966 = vmul.f32 %v605, %v45
    %v967 = vmul.f32 %v607, %v46
    %v968 = vadd.f32 %v964, %v965
    %969 = vadd.xlane.f32.xlu0 %v968
    %v970 = vpop.xlane.xlu0 %969
    %v971 = vadd.f32 %v966, %v967
    %972 = vadd.xlane.f32.xlu0 %v971
    %v973 = vpop.xlane.xlu0 %972
    %v974 = vadd.f32 %v970, %v973
    %v975 = vmul.f32 %v964, %v964
    %v976 = vmul.f32 %v965, %v965
    %v977 = vmul.f32 %v966, %v966
    %v978 = vmul.f32 %v967, %v967
    %v979 = vadd.f32 %v975, %v976
    %980 = vadd.xlane.f32.xlu0 %v979
    %v981 = vpop.xlane.xlu0 %980
    %v982 = vadd.f32 %v977, %v978
    %983 = vadd.xlane.f32.xlu0 %v982
    %v984 = vpop.xlane.xlu0 %983
    %v985 = vadd.f32 %v981, %v984
    %v986 = vmul.f32 %v974, 0.0025
    %v987 = vmul.f32 %v985, 0.0025
    %v988 = vmul.f32 %v986, %v986
    %v989 = vsub.f32 %v987, %v988
    %s990 = scalar_lea.vmem %s4, 40
    %v991 = vld [vmem:[%s990] sm:$0xff]
    %v992 = vadd.f32 %v989, 1e-05
    %v993 = vrsqrt.pop %v992
    %v994 = vmul.f32 %v991, %v993
    %s995 = scalar_lea.vmem %s5, 40
    %v996 = vld [vmem:[%s995] sm:$0xff]
    %v997 = vmul.f32 %v986, %v994
    %v998 = vsub.f32 %v996, %v997
    %1000 = vset.pattern.permute.xlu0 0
    %1001 = vperm.xlu0 %1000, %v959
    %v1002 = vpop.permute.xlu0 %1001
    %v1004 = vmul.f32 %v919, %v1002
    %v1005 = vmul.f32 %v921, %v1002
    %v1006 = vmul.f32 %v925, %v1002
    %v1007 = vmul.f32 %v927, %v1002
    %1009 = vset.pattern.permute.xlu0 0
    %1010 = vperm.xlu0 %1009, %v994
    %v1011 = vpop.permute.xlu0 %1010
    %v1013 = vmul.f32 %v599, %v1011
    %v1014 = vmul.f32 %v601, %v1011
    %v1015 = vmul.f32 %v605, %v1011
    %v1016 = vmul.f32 %v607, %v1011
    %v1017 = vadd.f32 %v1004, %v1013
    %v1018 = vadd.f32 %v1005, %v1014
    %v1019 = vadd.f32 %v1006, %v1015
    %v1020 = vadd.f32 %v1007, %v1016
    %v1021 = vadd.f32 %v963, %v998
    %1023 = vset.pattern.permute.xlu0 0
    %1024 = vperm.xlu0 %1023, %v1021
    %v1025 = vpop.permute.xlu0 %1024
    %v1027 = vadd.f32 %v1017, %v1025
    %v1028 = vadd.f32 %v1018, %v1025
    %v1029 = vadd.f32 %v1019, %v1025
    %v1030 = vadd.f32 %v1020, %v1025
    %s1031 = scalar_lea.vmem %s3, 32
    %v1032 = vld [vmem:[%s1031] sm:$0xff]
    %v1033 = vld [vmem:[%s1031 + $0x8] sm:$0xff]
    %v1035 = vsel %vm53, %v1032, 0
    %v1038 = vsel %vm53, %v1033, 0
    %1040 = vmatprep.subr.mxu0 0.0
    %1041 = vmatpush1.msra.mxu0 0.0
    %1042 = vmatprep.subr.mxu0 0.0
    %1043 = vmatpush1.msra.mxu0 0.0
    %1044 = vmatprep.subr.mxu0 0.0
    %1045 = vmatpush1.msra.mxu0 0.0
    %1046 = vmatprep.subr.mxu0 0.0
    %1047 = vmatpush1.msra.mxu0 0.0
    %1048 = vmatprep.subr.mxu0 0.0
    %1049 = vmatpush1.msra.mxu0 0.0
    %1050 = vmatprep.subr.mxu0 0.0
    %1051 = vmatpush1.msra.mxu0 0.0
    %1052 = vmatprep.subr.mxu0 0.0
    %1053 = vmatpush1.msra.mxu0 0.0
    %1054 = vmatprep.subr.mxu0 0.0
    %1055 = vmatpush1.msra.mxu0 0.0
    %1056 = vmatprep.subr.mxu0 0.0
    %1057 = vmatpush1.msra.mxu0 0.0
    %1058 = vmatprep.subr.mxu0 0.0
    %1059 = vmatpush1.msra.mxu0 0.0
    %1060 = vmatprep.subr.mxu0 0.0
    %1061 = vmatpush1.msra.mxu0 0.0
    %1062 = vmatprep.subr.mxu0 0.0
    %1063 = vmatpush1.msra.mxu0 0.0
    %1064 = vmatprep.subr.mxu0 0.0
    %1065 = vmatpush1.msra.mxu0 0.0
    %1066 = vmatprep.subr.mxu0 0.0
    %1067 = vmatpush1.msra.mxu0 0.0
    %1068 = vmatprep.subr.mxu0 %v1030
    %1069 = vmatpush1.msra.mxu0 %v1029
    %1070 = vmatprep.subr.mxu0 %v1028
    %1071 = vmatpush1.msra.mxu0 %v1027
    %1072 = vmatprep.subr.mxu0 0.0
    %1073 = vmatpush2.msra.mxu0 0.0
    %1074 = vmatprep.subr.mxu0 0.0
    %1075 = vmatpush2.msra.mxu0 0.0
    %1076 = vmatprep.subr.mxu0 0.0
    %1077 = vmatpush2.msra.mxu0 0.0
    %1078 = vmatprep.subr.mxu0 0.0
    %1079 = vmatpush2.msra.mxu0 0.0
    %1080 = vmatprep.subr.mxu0 0.0
    %1081 = vmatpush2.msra.mxu0 0.0
    %1082 = vmatprep.subr.mxu0 0.0
    %1083 = vmatpush2.msra.mxu0 0.0
    %1084 = vmatprep.subr.mxu0 0.0
    %1085 = vmatpush2.msra.mxu0 0.0
    %1086 = vmatprep.subr.mxu0 0.0
    %1087 = vmatpush2.msra.mxu0 0.0
    %1088 = vmatprep.subr.mxu0 0.0
    %1089 = vmatpush2.msra.mxu0 0.0
    %1090 = vmatprep.subr.mxu0 0.0
    %1091 = vmatpush2.msra.mxu0 0.0
    %1092 = vmatprep.subr.mxu0 0.0
    %1093 = vmatpush2.msra.mxu0 0.0
    %1094 = vmatprep.subr.mxu0 0.0
    %1095 = vmatpush2.msra.mxu0 0.0
    %1096 = vmatprep.subr.mxu0 0.0
    %1097 = vmatpush2.msra.mxu0 0.0
    %1098 = vmatprep.subr.mxu0 0.0
    %1099 = vmatpush2.msra.mxu0 0.0
    %1100 = vmatprep.subr.mxu0 0.0
    %1101 = vmatpush2.msra.mxu0 0.0
    %1102 = vmatprep.subr.mxu0 0.0
    %1103 = vmatpush2.msra.mxu0 0.0
    %1104 = vmatprep.mubr.f32.mxu0 0.0
    %1105 = vmatmul.mubr.f32.gmra.mxu0 %v1035
    %v1106 = vpop.f32.mrf.mxu0
    %v1107 = vadd.f32 0.0, %v1106
    %v1108 = vpop.f32.mrf.mxu0
    %v1109 = vadd.f32 0.0, %v1108
    %1110 = vmatprep.mubr.f32.mxu0 0.0
    %1111 = vmatmul.mubr.f32.gmra.mxu0 %v1038
    %v1112 = vpop.f32.mrf.mxu0
    %v1113 = vadd.f32 0.0, %v1112
    %v1114 = vpop.f32.mrf.mxu0
    %v1115 = vadd.f32 0.0, %v1114
    %1116 = vdwg.mxu0
    %v1117 = vmul.f32 %v1027, 0.2
    %v1118 = vmul.f32 %v1028, 0.2
    %v1119 = vmul.f32 %v1029, 0.2
    %v1120 = vmul.f32 %v1030, 0.2
    %v1121 = vmax.f32 %v1027, %v1117
    %v1122 = vmax.f32 %v1028, %v1118
    %v1123 = vmax.f32 %v1029, %v1119
    %v1124 = vmax.f32 %v1030, %v1120
    %1127 = vrot.lane.b32.xlu0 %v1121, 119
    %v1128 = vpop.permute.xlu0 %1127
    %1129 = vrot.lane.b32.xlu0 %v1123, 119
    %v1130 = vpop.permute.xlu0 %1129
    %1133 = vrot.lane.b32.xlu0 %v1121, 121
    %v1134 = vpop.permute.xlu0 %1133
    %1135 = vrot.lane.b32.xlu0 %v1123, 121
    %v1136 = vpop.permute.xlu0 %1135
    %1139 = vrot.lane.b32.xlu0 %v1121, 123
    %v1140 = vpop.permute.xlu0 %1139
    %1141 = vrot.lane.b32.xlu0 %v1123, 123
    %v1142 = vpop.permute.xlu0 %1141
    %1145 = vrot.lane.b32.xlu0 %v1121, 125
    %v1146 = vpop.permute.xlu0 %1145
    %1147 = vrot.lane.b32.xlu0 %v1123, 125
    %v1148 = vpop.permute.xlu0 %1147
    %1151 = vrot.lane.b32.xlu0 %v1121, 127
    %v1152 = vpop.permute.xlu0 %1151
    %1153 = vrot.lane.b32.xlu0 %v1123, 127
    %v1154 = vpop.permute.xlu0 %1153
    %1157 = vrot.lane.b32.xlu0 %v1121, 1
    %v1158 = vpop.permute.xlu0 %1157
    %1159 = vrot.lane.b32.xlu0 %v1123, 1
    %v1160 = vpop.permute.xlu0 %1159
    %1163 = vrot.lane.b32.xlu0 %v1121, 3
    %v1164 = vpop.permute.xlu0 %1163
    %1165 = vrot.lane.b32.xlu0 %v1123, 3
    %v1166 = vpop.permute.xlu0 %1165
    %1169 = vrot.lane.b32.xlu0 %v1121, 5
    %v1170 = vpop.permute.xlu0 %1169
    %1171 = vrot.lane.b32.xlu0 %v1123, 5
    %v1172 = vpop.permute.xlu0 %1171
    %1175 = vrot.lane.b32.xlu0 %v1121, 7
    %v1176 = vpop.permute.xlu0 %1175
    %1177 = vrot.lane.b32.xlu0 %v1123, 7
    %v1178 = vpop.permute.xlu0 %1177
    %1183 = vrot.lane.b32.xlu0 %v1121, 9
    %v1184 = vpop.permute.xlu0 %1183
    %1185 = vrot.lane.b32.xlu0 %v1122, 9
    %v1186 = vpop.permute.xlu0 %1185
    %1187 = vrot.lane.b32.xlu0 %v1123, 9
    %v1188 = vpop.permute.xlu0 %1187
    %1189 = vrot.lane.b32.xlu0 %v1124, 9
    %v1190 = vpop.permute.xlu0 %1189
    %vm1191 = vcmask 72704
    %v1192 = vsel %vm1191, %v1184, %v1186
    %v1193 = vsel %vm1191, %v1188, %v1190
    %v1198 = vsel %vm163, %v1128, %v1134
    %v1199 = vsel %vm163, %v1130, %v1136
    %v1200 = vsel %vm656, %v1198, %v1140
    %v1201 = vsel %vm656, %v1199, %v1142
    %v1202 = vsel %vm647, %v1200, %v1146
    %v1203 = vsel %vm647, %v1201, %v1148
    %vm1204 = vcmask 31744
    %v1205 = vsel %vm1204, %v1202, %v1152
    %v1206 = vsel %vm1204, %v1203, %v1154
    %vm1207 = vcmask 39936
    %v1208 = vsel %vm1207, %v1205, %v1158
    %v1209 = vsel %vm1207, %v1206, %v1160
    %vm1210 = vcmask 48128
    %v1211 = vsel %vm1210, %v1208, %v1164
    %v1212 = vsel %vm1210, %v1209, %v1166
    %vm1213 = vcmask 56320
    %v1214 = vsel %vm1213, %v1211, %v1170
    %v1215 = vsel %vm1213, %v1212, %v1172
    %vm1216 = vcmask 64512
    %v1217 = vsel %vm1216, %v1214, %v1176
    %v1218 = vsel %vm1216, %v1215, %v1178
    %v1219 = vsel %vm1191, %v1217, %v1184
    %v1220 = vsel %vm1191, %v1218, %v1188
    %1221 = vrot.lane.b32.xlu0 %v1122, 119
    %v1222 = vpop.permute.xlu0 %1221
    %1223 = vrot.lane.b32.xlu0 %v1124, 119
    %v1224 = vpop.permute.xlu0 %1223
    %vm1225 = vcmask 973824
    %v1226 = vsel %vm1225, %v1128, %v1222
    %v1227 = vsel %vm1225, %v1130, %v1224
    %1232 = vrot.lane.b32.xlu0 %v1122, 121
    %v1233 = vpop.permute.xlu0 %1232
    %1234 = vrot.lane.b32.xlu0 %v1124, 121
    %v1235 = vpop.permute.xlu0 %1234
    %1238 = vrot.lane.b32.xlu0 %v1122, 123
    %v1239 = vpop.permute.xlu0 %1238
    %1240 = vrot.lane.b32.xlu0 %v1124, 123
    %v1241 = vpop.permute.xlu0 %1240
    %1244 = vrot.lane.b32.xlu0 %v1122, 125
    %v1245 = vpop.permute.xlu0 %1244
    %1246 = vrot.lane.b32.xlu0 %v1124, 125
    %v1247 = vpop.permute.xlu0 %1246
    %1250 = vrot.lane.b32.xlu0 %v1122, 127
    %v1251 = vpop.permute.xlu0 %1250
    %1252 = vrot.lane.b32.xlu0 %v1124, 127
    %v1253 = vpop.permute.xlu0 %1252
    %1256 = vrot.lane.b32.xlu0 %v1122, 1
    %v1257 = vpop.permute.xlu0 %1256
    %1258 = vrot.lane.b32.xlu0 %v1124, 1
    %v1259 = vpop.permute.xlu0 %1258
    %1262 = vrot.lane.b32.xlu0 %v1122, 3
    %v1263 = vpop.permute.xlu0 %1262
    %1264 = vrot.lane.b32.xlu0 %v1124, 3
    %v1265 = vpop.permute.xlu0 %1264
    %1268 = vrot.lane.b32.xlu0 %v1122, 5
    %v1269 = vpop.permute.xlu0 %1268
    %1270 = vrot.lane.b32.xlu0 %v1124, 5
    %v1271 = vpop.permute.xlu0 %1270
    %1274 = vrot.lane.b32.xlu0 %v1122, 7
    %v1275 = vpop.permute.xlu0 %1274
    %1276 = vrot.lane.b32.xlu0 %v1124, 7
    %v1277 = vpop.permute.xlu0 %1276
    %vm1282 = vcmask 515072
    %v1283 = vsel %vm1282, %v1222, %v1233
    %v1284 = vsel %vm1282, %v1224, %v1235
    %vm1285 = vcmask 523264
    %v1286 = vsel %vm1285, %v1283, %v1239
    %v1287 = vsel %vm1285, %v1284, %v1241
    %vm1288 = vcmask 531456
    %v1289 = vsel %vm1288, %v1286, %v1245
    %v1290 = vsel %vm1288, %v1287, %v1247
    %vm1291 = vcmask 539648
    %v1292 = vsel %vm1291, %v1289, %v1251
    %v1293 = vsel %vm1291, %v1290, %v1253
    %vm1294 = vcmask 547840
    %v1295 = vsel %vm1294, %v1292, %v1257
    %v1296 = vsel %vm1294, %v1293, %v1259
    %vm1297 = vcmask 556032
    %v1298 = vsel %vm1297, %v1295, %v1263
    %v1299 = vsel %vm1297, %v1296, %v1265
    %v1300 = vsel %vm686, %v1298, %v1269
    %v1301 = vsel %vm686, %v1299, %v1271
    %v1302 = vsel %vm689, %v1300, %v1275
    %v1303 = vsel %vm689, %v1301, %v1277
    %v1304 = vsel %vm185, %v1302, %v1186
    %v1305 = vsel %vm185, %v1303, %v1190
    %v1306 = vsel %vm188, %v1304, %v1122
    %v1307 = vsel %vm188, %v1305, %v1124
    %s1308 = scalar_lea.vmem %s1, 32
    %v1309 = vld [vmem:[%s1308] sm:$0xff]
    %v1310 = vld [vmem:[%s1308 + $0x8] sm:$0xff]
    %v1312 = vsel %vm193, %v1309, 0
    %v1315 = vsel %vm193, %v1310, 0
    %1317 = vmatprep.subr.mxu0 0.0
    %1318 = vmatpush1.msra.mxu0 0.0
    %1319 = vmatprep.subr.mxu0 0.0
    %1320 = vmatpush1.msra.mxu0 0.0
    %1321 = vmatprep.subr.mxu0 0.0
    %1322 = vmatpush1.msra.mxu0 0.0
    %1323 = vmatprep.subr.mxu0 0.0
    %1324 = vmatpush1.msra.mxu0 0.0
    %1325 = vmatprep.subr.mxu0 0.0
    %1326 = vmatpush1.msra.mxu0 0.0
    %1327 = vmatprep.subr.mxu0 0.0
    %1328 = vmatpush1.msra.mxu0 0.0
    %1329 = vmatprep.subr.mxu0 0.0
    %1330 = vmatpush1.msra.mxu0 0.0
    %1331 = vmatprep.subr.mxu0 0.0
    %1332 = vmatpush1.msra.mxu0 0.0
    %1333 = vmatprep.subr.mxu0 0.0
    %1334 = vmatpush1.msra.mxu0 0.0
    %1335 = vmatprep.subr.mxu0 0.0
    %1336 = vmatpush1.msra.mxu0 0.0
    %1337 = vmatprep.subr.mxu0 %v1307
    %1338 = vmatpush1.msra.mxu0 %v1227
    %1339 = vmatprep.subr.mxu0 %v1306
    %1340 = vmatpush1.msra.mxu0 %v1226
    %1341 = vmatprep.subr.mxu0 %v1124
    %1342 = vmatpush1.msra.mxu0 %v1123
    %1343 = vmatprep.subr.mxu0 %v1122
    %1344 = vmatpush1.msra.mxu0 %v1121
    %1345 = vmatprep.subr.mxu0 %v1193
    %1346 = vmatpush1.msra.mxu0 %v1220
    %1347 = vmatprep.subr.mxu0 %v1192
    %1348 = vmatpush1.msra.mxu0 %v1219
    %1349 = vmatprep.subr.mxu0 0.0
    %1350 = vmatpush2.msra.mxu0 0.0
    %1351 = vmatprep.subr.mxu0 0.0
    %1352 = vmatpush2.msra.mxu0 0.0
    %1353 = vmatprep.subr.mxu0 0.0
    %1354 = vmatpush2.msra.mxu0 0.0
    %1355 = vmatprep.subr.mxu0 0.0
    %1356 = vmatpush2.msra.mxu0 0.0
    %1357 = vmatprep.subr.mxu0 0.0
    %1358 = vmatpush2.msra.mxu0 0.0
    %1359 = vmatprep.subr.mxu0 0.0
    %1360 = vmatpush2.msra.mxu0 0.0
    %1361 = vmatprep.subr.mxu0 0.0
    %1362 = vmatpush2.msra.mxu0 0.0
    %1363 = vmatprep.subr.mxu0 0.0
    %1364 = vmatpush2.msra.mxu0 0.0
    %1365 = vmatprep.subr.mxu0 0.0
    %1366 = vmatpush2.msra.mxu0 0.0
    %1367 = vmatprep.subr.mxu0 0.0
    %1368 = vmatpush2.msra.mxu0 0.0
    %1369 = vmatprep.subr.mxu0 0.0
    %1370 = vmatpush2.msra.mxu0 0.0
    %1371 = vmatprep.subr.mxu0 0.0
    %1372 = vmatpush2.msra.mxu0 0.0
    %1373 = vmatprep.subr.mxu0 0.0
    %1374 = vmatpush2.msra.mxu0 0.0
    %1375 = vmatprep.subr.mxu0 0.0
    %1376 = vmatpush2.msra.mxu0 0.0
    %1377 = vmatprep.subr.mxu0 0.0
    %1378 = vmatpush2.msra.mxu0 0.0
    %1379 = vmatprep.subr.mxu0 0.0
    %1380 = vmatpush2.msra.mxu0 0.0
    %1381 = vmatprep.mubr.f32.mxu0 0.0
    %1382 = vmatmul.mubr.f32.gmra.mxu0 %v1312
    %v1383 = vpop.f32.mrf.mxu0
    %v1384 = vadd.f32 0.0, %v1383
    %v1385 = vpop.f32.mrf.mxu0
    %v1386 = vadd.f32 0.0, %v1385
    %1387 = vmatprep.mubr.f32.mxu0 0.0
    %1388 = vmatmul.mubr.f32.gmra.mxu0 %v1315
    %v1389 = vpop.f32.mrf.mxu0
    %v1390 = vadd.f32 0.0, %v1389
    %v1391 = vpop.f32.mrf.mxu0
    %v1392 = vadd.f32 0.0, %v1391
    %1393 = vdwg.mxu0
    %v1394 = vmul.f32 %v1384, %v45
    %v1395 = vmul.f32 %v1386, %v46
    %v1396 = vmul.f32 %v1390, %v45
    %v1397 = vmul.f32 %v1392, %v46
    %v1398 = vadd.f32 %v1394, %v1395
    %1399 = vadd.xlane.f32.xlu0 %v1398
    %v1400 = vpop.xlane.xlu0 %1399
    %v1401 = vadd.f32 %v1396, %v1397
    %1402 = vadd.xlane.f32.xlu0 %v1401
    %v1403 = vpop.xlane.xlu0 %1402
    %v1404 = vadd.f32 %v1400, %v1403
    %v1405 = vmul.f32 %v1394, %v1394
    %v1406 = vmul.f32 %v1395, %v1395
    %v1407 = vmul.f32 %v1396, %v1396
    %v1408 = vmul.f32 %v1397, %v1397
    %v1409 = vadd.f32 %v1405, %v1406
    %1410 = vadd.xlane.f32.xlu0 %v1409
    %v1411 = vpop.xlane.xlu0 %1410
    %v1412 = vadd.f32 %v1407, %v1408
    %1413 = vadd.xlane.f32.xlu0 %v1412
    %v1414 = vpop.xlane.xlu0 %1413
    %v1415 = vadd.f32 %v1411, %v1414
    %v1416 = vmul.f32 %v1404, 0.0025
    %v1417 = vmul.f32 %v1415, 0.0025
    %v1418 = vmul.f32 %v1416, %v1416
    %v1419 = vsub.f32 %v1417, %v1418
    %s1420 = scalar_lea.vmem %s4, 48
    %v1421 = vld [vmem:[%s1420] sm:$0xff]
    %v1422 = vadd.f32 %v1419, 1e-05
    %v1423 = vrsqrt.pop %v1422
    %v1424 = vmul.f32 %v1421, %v1423
    %s1425 = scalar_lea.vmem %s5, 48
    %v1426 = vld [vmem:[%s1425] sm:$0xff]
    %v1427 = vmul.f32 %v1416, %v1424
    %v1428 = vsub.f32 %v1426, %v1427
    %1430 = vset.pattern.permute.xlu0 0
    %1431 = vperm.xlu0 %1430, %v1424
    %v1432 = vpop.permute.xlu0 %1431
    %v1434 = vmul.f32 %v1384, %v1432
    %v1435 = vmul.f32 %v1386, %v1432
    %v1436 = vmul.f32 %v1390, %v1432
    %v1437 = vmul.f32 %v1392, %v1432
    %1439 = vset.pattern.permute.xlu0 0
    %1440 = vperm.xlu0 %1439, %v1428
    %v1441 = vpop.permute.xlu0 %1440
    %v1443 = vadd.f32 %v1434, %v1441
    %v1444 = vadd.f32 %v1435, %v1441
    %v1445 = vadd.f32 %v1436, %v1441
    %v1446 = vadd.f32 %v1437, %v1441
    %v1447 = vmul.f32 %v1443, 0.2
    %v1448 = vmul.f32 %v1444, 0.2
    %v1449 = vmul.f32 %v1445, 0.2
    %v1450 = vmul.f32 %v1446, 0.2
    %v1451 = vmax.f32 %v1443, %v1447
    %v1452 = vmax.f32 %v1444, %v1448
    %v1453 = vmax.f32 %v1445, %v1449
    %v1454 = vmax.f32 %v1446, %v1450
    %s1455 = scalar_lea.vmem %s2, 32
    %v1456 = vld [vmem:[%s1455] sm:$0xff]
    %v1457 = vld [vmem:[%s1455 + $0x8] sm:$0xff]
    %v1459 = vsel %vm53, %v1456, 0
    %v1462 = vsel %vm53, %v1457, 0
    %1464 = vmatprep.subr.mxu0 0.0
    %1465 = vmatpush1.msra.mxu0 0.0
    %1466 = vmatprep.subr.mxu0 0.0
    %1467 = vmatpush1.msra.mxu0 0.0
    %1468 = vmatprep.subr.mxu0 0.0
    %1469 = vmatpush1.msra.mxu0 0.0
    %1470 = vmatprep.subr.mxu0 0.0
    %1471 = vmatpush1.msra.mxu0 0.0
    %1472 = vmatprep.subr.mxu0 0.0
    %1473 = vmatpush1.msra.mxu0 0.0
    %1474 = vmatprep.subr.mxu0 0.0
    %1475 = vmatpush1.msra.mxu0 0.0
    %1476 = vmatprep.subr.mxu0 0.0
    %1477 = vmatpush1.msra.mxu0 0.0
    %1478 = vmatprep.subr.mxu0 0.0
    %1479 = vmatpush1.msra.mxu0 0.0
    %1480 = vmatprep.subr.mxu0 0.0
    %1481 = vmatpush1.msra.mxu0 0.0
    %1482 = vmatprep.subr.mxu0 0.0
    %1483 = vmatpush1.msra.mxu0 0.0
    %1484 = vmatprep.subr.mxu0 0.0
    %1485 = vmatpush1.msra.mxu0 0.0
    %1486 = vmatprep.subr.mxu0 0.0
    %1487 = vmatpush1.msra.mxu0 0.0
    %1488 = vmatprep.subr.mxu0 0.0
    %1489 = vmatpush1.msra.mxu0 0.0
    %1490 = vmatprep.subr.mxu0 0.0
    %1491 = vmatpush1.msra.mxu0 0.0
    %1492 = vmatprep.subr.mxu0 %v1454
    %1493 = vmatpush1.msra.mxu0 %v1453
    %1494 = vmatprep.subr.mxu0 %v1452
    %1495 = vmatpush1.msra.mxu0 %v1451
    %1496 = vmatprep.subr.mxu0 0.0
    %1497 = vmatpush2.msra.mxu0 0.0
    %1498 = vmatprep.subr.mxu0 0.0
    %1499 = vmatpush2.msra.mxu0 0.0
    %1500 = vmatprep.subr.mxu0 0.0
    %1501 = vmatpush2.msra.mxu0 0.0
    %1502 = vmatprep.subr.mxu0 0.0
    %1503 = vmatpush2.msra.mxu0 0.0
    %1504 = vmatprep.subr.mxu0 0.0
    %1505 = vmatpush2.msra.mxu0 0.0
    %1506 = vmatprep.subr.mxu0 0.0
    %1507 = vmatpush2.msra.mxu0 0.0
    %1508 = vmatprep.subr.mxu0 0.0
    %1509 = vmatpush2.msra.mxu0 0.0
    %1510 = vmatprep.subr.mxu0 0.0
    %1511 = vmatpush2.msra.mxu0 0.0
    %1512 = vmatprep.subr.mxu0 0.0
    %1513 = vmatpush2.msra.mxu0 0.0
    %1514 = vmatprep.subr.mxu0 0.0
    %1515 = vmatpush2.msra.mxu0 0.0
    %1516 = vmatprep.subr.mxu0 0.0
    %1517 = vmatpush2.msra.mxu0 0.0
    %1518 = vmatprep.subr.mxu0 0.0
    %1519 = vmatpush2.msra.mxu0 0.0
    %1520 = vmatprep.subr.mxu0 0.0
    %1521 = vmatpush2.msra.mxu0 0.0
    %1522 = vmatprep.subr.mxu0 0.0
    %1523 = vmatpush2.msra.mxu0 0.0
    %1524 = vmatprep.subr.mxu0 0.0
    %1525 = vmatpush2.msra.mxu0 0.0
    %1526 = vmatprep.subr.mxu0 0.0
    %1527 = vmatpush2.msra.mxu0 0.0
    %1528 = vmatprep.mubr.f32.mxu0 0.0
    %1529 = vmatmul.mubr.f32.gmra.mxu0 %v1459
    %v1530 = vpop.f32.mrf.mxu0
    %v1531 = vadd.f32 0.0, %v1530
    %v1532 = vpop.f32.mrf.mxu0
    %v1533 = vadd.f32 0.0, %v1532
    %1534 = vmatprep.mubr.f32.mxu0 0.0
    %1535 = vmatmul.mubr.f32.gmra.mxu0 %v1462
    %v1536 = vpop.f32.mrf.mxu0
    %v1537 = vadd.f32 0.0, %v1536
    %v1538 = vpop.f32.mrf.mxu0
    %v1539 = vadd.f32 0.0, %v1538
    %1540 = vdwg.mxu0
    %v1541 = vmul.f32 %v1531, %v45
    %v1542 = vmul.f32 %v1533, %v46
    %v1543 = vmul.f32 %v1537, %v45
    %v1544 = vmul.f32 %v1539, %v46
    %v1545 = vadd.f32 %v1541, %v1542
    %1546 = vadd.xlane.f32.xlu0 %v1545
    %v1547 = vpop.xlane.xlu0 %1546
    %v1548 = vadd.f32 %v1543, %v1544
    %1549 = vadd.xlane.f32.xlu0 %v1548
    %v1550 = vpop.xlane.xlu0 %1549
    %v1551 = vadd.f32 %v1547, %v1550
    %v1552 = vmul.f32 %v1541, %v1541
    %v1553 = vmul.f32 %v1542, %v1542
    %v1554 = vmul.f32 %v1543, %v1543
    %v1555 = vmul.f32 %v1544, %v1544
    %v1556 = vadd.f32 %v1552, %v1553
    %1557 = vadd.xlane.f32.xlu0 %v1556
    %v1558 = vpop.xlane.xlu0 %1557
    %v1559 = vadd.f32 %v1554, %v1555
    %1560 = vadd.xlane.f32.xlu0 %v1559
    %v1561 = vpop.xlane.xlu0 %1560
    %v1562 = vadd.f32 %v1558, %v1561
    %v1563 = vmul.f32 %v1551, 0.0025
    %v1564 = vmul.f32 %v1562, 0.0025
    %v1565 = vmul.f32 %v1563, %v1563
    %v1566 = vsub.f32 %v1564, %v1565
    %s1567 = scalar_lea.vmem %s4, 56
    %v1568 = vld [vmem:[%s1567] sm:$0xff]
    %v1569 = vadd.f32 %v1566, 1e-05
    %v1570 = vrsqrt.pop %v1569
    %v1571 = vmul.f32 %v1568, %v1570
    %s1572 = scalar_lea.vmem %s5, 56
    %v1573 = vld [vmem:[%s1572] sm:$0xff]
    %v1574 = vmul.f32 %v1563, %v1571
    %v1575 = vsub.f32 %v1573, %v1574
    %v1576 = vmul.f32 %v1107, %v45
    %v1577 = vmul.f32 %v1109, %v46
    %v1578 = vmul.f32 %v1113, %v45
    %v1579 = vmul.f32 %v1115, %v46
    %v1580 = vadd.f32 %v1576, %v1577
    %1581 = vadd.xlane.f32.xlu0 %v1580
    %v1582 = vpop.xlane.xlu0 %1581
    %v1583 = vadd.f32 %v1578, %v1579
    %1584 = vadd.xlane.f32.xlu0 %v1583
    %v1585 = vpop.xlane.xlu0 %1584
    %v1586 = vadd.f32 %v1582, %v1585
    %v1587 = vmul.f32 %v1576, %v1576
    %v1588 = vmul.f32 %v1577, %v1577
    %v1589 = vmul.f32 %v1578, %v1578
    %v1590 = vmul.f32 %v1579, %v1579
    %v1591 = vadd.f32 %v1587, %v1588
    %1592 = vadd.xlane.f32.xlu0 %v1591
    %v1593 = vpop.xlane.xlu0 %1592
    %v1594 = vadd.f32 %v1589, %v1590
    %1595 = vadd.xlane.f32.xlu0 %v1594
    %v1596 = vpop.xlane.xlu0 %1595
    %v1597 = vadd.f32 %v1593, %v1596
    %v1598 = vmul.f32 %v1586, 0.0025
    %v1599 = vmul.f32 %v1597, 0.0025
    %v1600 = vmul.f32 %v1598, %v1598
    %v1601 = vsub.f32 %v1599, %v1600
    %s1602 = scalar_lea.vmem %s4, 64
    %v1603 = vld [vmem:[%s1602] sm:$0xff]
    %v1604 = vadd.f32 %v1601, 1e-05
    %v1605 = vrsqrt.pop %v1604
    %v1606 = vmul.f32 %v1603, %v1605
    %s1607 = scalar_lea.vmem %s5, 64
    %v1608 = vld [vmem:[%s1607] sm:$0xff]
    %v1609 = vmul.f32 %v1598, %v1606
    %v1610 = vsub.f32 %v1608, %v1609
    %1612 = vset.pattern.permute.xlu0 0
    %1613 = vperm.xlu0 %1612, %v1571
    %v1614 = vpop.permute.xlu0 %1613
    %v1616 = vmul.f32 %v1531, %v1614
    %v1617 = vmul.f32 %v1533, %v1614
    %v1618 = vmul.f32 %v1537, %v1614
    %v1619 = vmul.f32 %v1539, %v1614
    %1621 = vset.pattern.permute.xlu0 0
    %1622 = vperm.xlu0 %1621, %v1606
    %v1623 = vpop.permute.xlu0 %1622
    %v1625 = vmul.f32 %v1107, %v1623
    %v1626 = vmul.f32 %v1109, %v1623
    %v1627 = vmul.f32 %v1113, %v1623
    %v1628 = vmul.f32 %v1115, %v1623
    %v1629 = vadd.f32 %v1616, %v1625
    %v1630 = vadd.f32 %v1617, %v1626
    %v1631 = vadd.f32 %v1618, %v1627
    %v1632 = vadd.f32 %v1619, %v1628
    %v1633 = vadd.f32 %v1575, %v1610
    %1635 = vset.pattern.permute.xlu0 0
    %1636 = vperm.xlu0 %1635, %v1633
    %v1637 = vpop.permute.xlu0 %1636
    %v1639 = vadd.f32 %v1629, %v1637
    %v1640 = vadd.f32 %v1630, %v1637
    %v1641 = vadd.f32 %v1631, %v1637
    %v1642 = vadd.f32 %v1632, %v1637
    %1643 = vst [vmem:[#allocation5] sm:$0xff] %v1639
    %1644 = vst [vmem:[#allocation5 + $0x8] sm:$0xff] %v1640
    %1645 = vst [vmem:[#allocation5 + $0x10] sm:$0xff] %v1641
    %1646 = vst [vmem:[#allocation5 + $0x18] sm:$0xff] %v1642
    // Predicated region
    $region30: #{tpu_custom_call.1} parent=1 // pred_check
      _
    $region31: #{tpu_custom_call.1} parent=1 // pred_check_branch
      %1648 = sbr.rel (0) target = $region33
    $region32: #{tpu_custom_call.1} parent=1 // pred_region
      %s1650 = ssub.s32 512, 512
      %1651 = vsyncadd [#allocation4], %s1650
      %s1652 = sshll.u32 [#allocation5], 4
      %s1653 = int_to_ptr.vmem [resolvable:$true] %s1652
      %1658 = dma.vmem_to_hbm [thread:$0]  %s1653, 512, %s6, [#allocation4], 256, 256, 16
    $region33: #{tpu_custom_call.1} parent=1 // pred_fallthru
      _
    // Predicated region
    $region34: #{tpu_custom_call.1} parent=1 // pred_check
      _
    $region35: #{tpu_custom_call.1} parent=1 // pred_check_branch
      %1660 = sbr.rel (0) target = $region37
    $region36: #{tpu_custom_call.1} parent=1 // pred_region
      %1661 = dma.done [#allocation4], 512
    $region37: #{tpu_custom_call.1} parent=1 // pred_fallthru
      _
    %1662 = vsyncpa [#allocation3], 1
    %1663 = vsyncpa [#allocation4], 1

</llo_original>
